<compile_context>
chip_gen: v7x
topology: tpu7x:2x2x1
jax: 0.10.0
libtpu: 0.0.40
codegen_flags: <defaults>
</compile_context>

<pallas_src>
import functools
import math

import jax
import jax.numpy as jnp
from jax.experimental import pallas as pl
from jax.experimental.pallas import tpu as pltpu


def _layernorm(x, gamma, beta, eps=1e-5):
    mean = jnp.mean(x, axis=-1, keepdims=True)
    var = jnp.mean(jnp.square(x - mean), axis=-1, keepdims=True)
    return (x - mean) * jax.lax.rsqrt(var + eps) * gamma + beta


def encoder_kernel(x_ref,
                   wq_ref, bq_ref, wk_ref, bk_ref, wv_ref, bv_ref,
                   wo_ref, bo_ref,
                   g1_ref, be1_ref,
                   w1_ref, b1_ref, w2_ref, b2_ref,
                   g2_ref, be2_ref,
                   o_ref,
                   *, h, chunk_size):
    f32 = jnp.float32
    bf16 = jnp.bfloat16

    xb = x_ref[0]                                      # (chunk, D), bf16
    D = xb.shape[-1]

    # Broadcast activations across heads once so every contraction below is a clean
    # leading-batch-dim MXU matmul (no in-kernel transpose / concat / head slicing).
    x3 = jnp.broadcast_to(xb, (h, chunk_size, D))      # (h, chunk, D) bf16

    # ---- Q / K / V projections, all heads batched ---------------------------------
    Qh = jnp.einsum('hcd,hdq->hcq', x3, wq_ref[...],
                    preferred_element_type=f32) + bq_ref[...]      # (h, chunk, q) f32
    Kh = jnp.einsum('hcd,hdq->hcq', x3, wk_ref[...],
                    preferred_element_type=f32) + bk_ref[...]      # (h, chunk, q) f32
    Vh = jnp.einsum('hcd,hdv->hcv', x3, wv_ref[...],
                    preferred_element_type=f32) + bv_ref[...]      # (h, chunk, v) f32

    # ---- chunk-local attention ------------------------------------------------------
    # NOTE: scaling is 1/sqrt(chunk_size), as in the reference MultiHeadAttentionChunk.
    inv_scale = 1.0 / math.sqrt(chunk_size)
    s = jnp.einsum('hiq,hjq->hij', Qh.astype(bf16), Kh.astype(bf16),
                   preferred_element_type=f32) * inv_scale          # (h, chunk, chunk)
    s = s - jnp.max(s, axis=-1, keepdims=True)
    e = jnp.exp(s)
    p = e * pl.reciprocal(jnp.sum(e, axis=-1, keepdims=True), approx=True)

    att = jnp.einsum('hij,hjv->hiv', p.astype(bf16), Vh.astype(bf16),
                     preferred_element_type=f32)                    # (h, chunk, v)

    # ---- output projection, fused over heads:  sum_h  att_h @ Wo_h -------------------
    sa_h = jnp.einsum('hiv,hvd->hid', att.astype(bf16), wo_ref[...],
                      preferred_element_type=f32)                   # (h, chunk, D)
    sa = jnp.sum(sa_h, axis=0) + bo_ref[...]                        # (chunk, D)

    # residual + LayerNorm 1   (dropout == identity)
    y1 = _layernorm(sa + xb.astype(f32), g1_ref[...], be1_ref[...])

    # ---- position-wise feed forward ---------------------------------------------------
    hdn = jnp.dot(y1.astype(bf16), w1_ref[...],
                  preferred_element_type=f32) + b1_ref[...]
    hdn = jnp.maximum(hdn, 0.0)
    ff = jnp.dot(hdn.astype(bf16), w2_ref[...],
                 preferred_element_type=f32) + b2_ref[...]

    # residual + LayerNorm 2   (dropout == identity)
    o_ref[0] = _layernorm(ff + y1, g2_ref[...], be2_ref[...]).astype(o_ref.dtype)


def encoder_forward(x, params, *, h, q, v, chunk_size):
    B, Kseq, D = x.shape
    assert Kseq % chunk_size == 0, "K must be divisible by chunk_size"
    assert chunk_size % 8 == 0, "chunk_size must be a multiple of 8 (sublane tiling)"
    n_chunk = Kseq // chunk_size
    d_ff = params["w1"].shape[-1]

    bf16 = jnp.bfloat16
    f32 = jnp.float32

    # Pre-split projection weights per head on the host so the kernel runs clean
    # leading-batch-dim matmuls (no in-kernel head slicing / concatenation).
    wq_h = params["wq"].reshape(D, h, q).transpose(1, 0, 2).astype(bf16)   # (h, D, q)
    wk_h = params["wk"].reshape(D, h, q).transpose(1, 0, 2).astype(bf16)   # (h, D, q)
    wv_h = params["wv"].reshape(D, h, v).transpose(1, 0, 2).astype(bf16)   # (h, D, v)
    wo_h = params["wo"].reshape(h, v, D).astype(bf16)                      # (h, v, D)
    bq_h = params["bq"].reshape(h, 1, q).astype(f32)
    bk_h = params["bk"].reshape(h, 1, q).astype(f32)
    bv_h = params["bv"].reshape(h, 1, v).astype(f32)

    weight_arrays = [
        wq_h, bq_h, wk_h, bk_h, wv_h, bv_h, wo_h,
        params["bo"].astype(f32),
        params["g1"].astype(f32), params["be1"].astype(f32),
        params["w1"].astype(bf16), params["b1"].astype(f32),
        params["w2"].astype(bf16), params["b2"].astype(f32),
        params["g2"].astype(f32), params["be2"].astype(f32),
    ]

    def const_spec(a):
        nd = a.ndim
        return pl.BlockSpec(a.shape, lambda b, c, nd=nd: (0,) * nd)

    in_specs = ([pl.BlockSpec((1, chunk_size, D), lambda b, c: (b, c, 0))]
                + [const_spec(w) for w in weight_arrays])
    out_spec = pl.BlockSpec((1, chunk_size, D), lambda b, c: (b, c, 0))

    # Explicit scoped-VMEM budget: double-buffered x/out tiles + resident weights
    # + generous room for in-kernel intermediates (scores, FFN hidden, LN temps).
    w_bytes = sum(int(a.size) * a.dtype.itemsize for a in weight_arrays)
    tile_bytes = 2 * chunk_size * D * (2 + 4)                 # in (bf16) + out (f32), x2 buffers
    interm_bytes = 4 * (h * chunk_size * chunk_size
                        + 3 * h * chunk_size * max(q, v)
                        + chunk_size * d_ff
                        + 4 * chunk_size * D)
    vmem_limit = int(2 * w_bytes + tile_bytes + 4 * interm_bytes + (4 << 20))
    vmem_limit = min(max(vmem_limit, 32 << 20), 64 << 20)     # stay within v7x physical VMEM

    kernel = functools.partial(encoder_kernel, h=h, chunk_size=chunk_size)

    return pl.pallas_call(
        kernel,
        out_shape=jax.ShapeDtypeStruct((B, Kseq, D), jnp.float32),
        grid_spec=pltpu.PrefetchScalarGridSpec(
            num_scalar_prefetch=0,
            grid=(B, n_chunk),
            in_specs=in_specs,
            out_specs=out_spec,
        ),
        compiler_params=pltpu.CompilerParams(
            dimension_semantics=("parallel", "parallel"),
            vmem_limit_bytes=vmem_limit),
    )(x.astype(bf16), *weight_arrays)


def encoder_ref(x, params, *, h, q, v, chunk_size):
    """Pure-JAX reference with the same semantics.  Matmul inputs are cast to bf16
    (mirroring the kernel's MXU precision); softmax / LayerNorm stay in f32."""
    bf16 = jnp.bfloat16
    f32 = jnp.float32

    def mm(a, b):
        return jnp.dot(a.astype(bf16), b.astype(bf16), preferred_element_type=f32)

    def one_batch(xb):
        xb16 = xb.astype(bf16).astype(f32)
        Kseq = xb.shape[0]
        n_chunk = Kseq // chunk_size
        Q = mm(xb16, params["wq"]) + params["bq"][0]
        K_ = mm(xb16, params["wk"]) + params["bk"][0]
        V = mm(xb16, params["wv"]) + params["bv"][0]
        inv_scale = 1.0 / math.sqrt(chunk_size)
        heads = []
        for hh in range(h):
            chunks = []
            for c in range(n_chunk):
                r0, r1 = c * chunk_size, (c + 1) * chunk_size
                qs = Q[r0:r1, hh * q:(hh + 1) * q]
                ks = K_[r0:r1, hh * q:(hh + 1) * q]
                vs = V[r0:r1, hh * v:(hh + 1) * v]
                s = mm(qs, ks.T) * inv_scale
                p = jax.nn.softmax(s, axis=-1)
                chunks.append(mm(p, vs))
            heads.append(jnp.concatenate(chunks, axis=0))
        att = jnp.concatenate(heads, axis=1)
        sa = mm(att, params["wo"]) + params["bo"][0]
        y1 = _layernorm(sa + xb16, params["g1"][0], params["be1"][0])
        hdn = jnp.maximum(mm(y1, params["w1"]) + params["b1"][0], 0.0)
        ff = mm(hdn, params["w2"]) + params["b2"][0]
        return _layernorm(ff + y1, params["g2"][0], params["be2"][0])

    return jax.vmap(one_batch)(x)


def make_params(key, d_model, q, v, h, d_ff):
    ks = jax.random.split(key, 12)
    s = 0.1
    p = {
        # Linear weights stored pre-transposed: y = x @ W + b
        "wq": s * jax.random.normal(ks[0], (d_model, q * h), jnp.float32),
        "bq": s * jax.random.normal(ks[1], (1, q * h), jnp.float32),
        "wk": s * jax.random.normal(ks[2], (d_model, q * h), jnp.float32),
        "bk": s * jax.random.normal(ks[3], (1, q * h), jnp.float32),
        "wv": s * jax.random.normal(ks[4], (d_model, v * h), jnp.float32),
        "bv": s * jax.random.normal(ks[5], (1, v * h), jnp.float32),
        "wo": s * jax.random.normal(ks[6], (v * h, d_model), jnp.float32),
        "bo": s * jax.random.normal(ks[7], (1, d_model), jnp.float32),
        # LayerNorm params (non-trivial values for a stronger test)
        "g1": 1.0 + s * jax.random.normal(ks[8], (1, d_model), jnp.float32),
        "be1": s * jax.random.normal(ks[9], (1, d_model), jnp.float32),
        "g2": 1.0 + s * jax.random.normal(ks[10], (1, d_model), jnp.float32),
        "be2": s * jax.random.normal(ks[11], (1, d_model), jnp.float32),
    }
    ks2 = jax.random.split(jax.random.fold_in(key, 1), 4)
    p["w1"] = s * jax.random.normal(ks2[0], (d_model, d_ff), jnp.float32)
    p["b1"] = s * jax.random.normal(ks2[1], (1, d_ff), jnp.float32)
    p["w2"] = s * jax.random.normal(ks2[2], (d_ff, d_model), jnp.float32)
    p["b2"] = s * jax.random.normal(ks2[3], (1, d_model), jnp.float32)
    return p


if __name__ == "__main__":
    # Small config consistent with the module's forward:
    # x: (batch, K, d_model); chunk attention with chunk_size | K.
    # d_model = 128 keeps the output store lane-dense.
    B, Kseq, d_model = 2, 16, 128
    q = v = 8
    h = 2
    chunk_size = 8          # reference default is 168; scaled down for the small test
    d_ff = 256              # reference default is 2048; scaled down for the small test

    key = jax.random.PRNGKey(0)
    kx, kp = jax.random.split(key)
    x = jax.random.normal(kx, (B, Kseq, d_model), jnp.float32)
    params = make_params(kp, d_model, q, v, h, d_ff)

    out = encoder_forward(x, params, h=h, q=q, v=v, chunk_size=chunk_size)
    out = jax.block_until_ready(out)

    ref = encoder_ref(x, params, h=h, q=q, v=v, chunk_size=chunk_size)
    assert out.shape == (B, Kseq, d_model)
    assert jnp.allclose(out, ref, rtol=2e-2, atol=2e-2), "mismatch vs JAX reference"

    print("KERNEL_OK")
</pallas_src>

<mosaic_0001>
module attributes {stable_mosaic.version = 11 : i64} {
  func.func @encoder_kernel(%arg0: i32, %arg1: i32, %arg2: memref<1x8x128xbf16, #tpu.memory_space<vmem>>, %arg3: memref<2x128x8xbf16, #tpu.memory_space<vmem>>, %arg4: memref<2x1x8xf32, #tpu.memory_space<vmem>>, %arg5: memref<2x128x8xbf16, #tpu.memory_space<vmem>>, %arg6: memref<2x1x8xf32, #tpu.memory_space<vmem>>, %arg7: memref<2x128x8xbf16, #tpu.memory_space<vmem>>, %arg8: memref<2x1x8xf32, #tpu.memory_space<vmem>>, %arg9: memref<2x8x128xbf16, #tpu.memory_space<vmem>>, %arg10: memref<1x128xf32, #tpu.memory_space<vmem>>, %arg11: memref<1x128xf32, #tpu.memory_space<vmem>>, %arg12: memref<1x128xf32, #tpu.memory_space<vmem>>, %arg13: memref<128x256xbf16, #tpu.memory_space<vmem>>, %arg14: memref<1x256xf32, #tpu.memory_space<vmem>>, %arg15: memref<256x128xbf16, #tpu.memory_space<vmem>>, %arg16: memref<1x128xf32, #tpu.memory_space<vmem>>, %arg17: memref<1x128xf32, #tpu.memory_space<vmem>>, %arg18: memref<1x128xf32, #tpu.memory_space<vmem>>, %arg19: memref<1x8x128xf32, #tpu.memory_space<vmem>>) attributes {dimension_semantics = [#tpu.dimension_semantics<parallel>, #tpu.dimension_semantics<parallel>], iteration_bounds = array<i64: 2, 2>, scalar_prefetch = 0 : i64, scratch_operands = 0 : i64, tpu.core_type = #tpu.core_type<tc>, window_params = [{transform_indices = @transform_0, window_bounds = array<i64: 1, 8, 128>}, {pipeline_mode = #tpu.pipeline_mode<synchronous>, transform_indices = @transform_1, window_bounds = array<i64: 2, 128, 8>}, {pipeline_mode = #tpu.pipeline_mode<synchronous>, transform_indices = @transform_2, window_bounds = array<i64: 2, 1, 8>}, {pipeline_mode = #tpu.pipeline_mode<synchronous>, transform_indices = @transform_3, window_bounds = array<i64: 2, 128, 8>}, {pipeline_mode = #tpu.pipeline_mode<synchronous>, transform_indices = @transform_4, window_bounds = array<i64: 2, 1, 8>}, {pipeline_mode = #tpu.pipeline_mode<synchronous>, transform_indices = @transform_5, window_bounds = array<i64: 2, 128, 8>}, {pipeline_mode = #tpu.pipeline_mode<synchronous>, transform_indices = @transform_6, window_bounds = array<i64: 2, 1, 8>}, {pipeline_mode = #tpu.pipeline_mode<synchronous>, transform_indices = @transform_7, window_bounds = array<i64: 2, 8, 128>}, {pipeline_mode = #tpu.pipeline_mode<synchronous>, transform_indices = @transform_8, window_bounds = array<i64: 1, 128>}, {pipeline_mode = #tpu.pipeline_mode<synchronous>, transform_indices = @transform_9, window_bounds = array<i64: 1, 128>}, {pipeline_mode = #tpu.pipeline_mode<synchronous>, transform_indices = @transform_10, window_bounds = array<i64: 1, 128>}, {pipeline_mode = #tpu.pipeline_mode<synchronous>, transform_indices = @transform_11, window_bounds = array<i64: 128, 256>}, {pipeline_mode = #tpu.pipeline_mode<synchronous>, transform_indices = @transform_12, window_bounds = array<i64: 1, 256>}, {pipeline_mode = #tpu.pipeline_mode<synchronous>, transform_indices = @transform_13, window_bounds = array<i64: 256, 128>}, {pipeline_mode = #tpu.pipeline_mode<synchronous>, transform_indices = @transform_14, window_bounds = array<i64: 1, 128>}, {pipeline_mode = #tpu.pipeline_mode<synchronous>, transform_indices = @transform_15, window_bounds = array<i64: 1, 128>}, {pipeline_mode = #tpu.pipeline_mode<synchronous>, transform_indices = @transform_16, window_bounds = array<i64: 1, 128>}, {transform_indices = @transform_17, window_bounds = array<i64: 1, 8, 128>}]} {
    %c0 = arith.constant 0 : index
    %c0_0 = arith.constant 0 : index
    %c0_1 = arith.constant 0 : index
    %0 = vector.load %arg2[%c0, %c0_0, %c0_1] : memref<1x8x128xbf16, #tpu.memory_space<vmem>>, vector<1x8x128xbf16>
    %1 = vector.shape_cast %0 : vector<1x8x128xbf16> to vector<8x128xbf16>
    %2 = vector.shape_cast %1 : vector<8x128xbf16> to vector<1x8x128xbf16>
    %3 = vector.broadcast %2 : vector<1x8x128xbf16> to vector<2x8x128xbf16>
    %c0_2 = arith.constant 0 : index
    %c0_3 = arith.constant 0 : index
    %c0_4 = arith.constant 0 : index
    %4 = vector.load %arg3[%c0_2, %c0_3, %c0_4] : memref<2x128x8xbf16, #tpu.memory_space<vmem>>, vector<2x128x8xbf16>
    "tpu.trace_start"() <{level = 10 : i32, message = "hcd,hdq->hcq"}> : () -> ()
    %cst = arith.constant dense<0.000000e+00> : vector<2x8x8xf32>
    %5 = tpu.matmul %3, %4, %cst {dimension_numbers = #tpu.dot_dimension_numbers<[2], [1], [1], [2], [0, 0, 0, 1, 1, 2], [0], [0]>} : vector<2x8x128xbf16>, vector<2x128x8xbf16>, vector<2x8x8xf32> -> vector<2x8x8xf32>
    "tpu.trace_stop"() : () -> ()
    %c0_5 = arith.constant 0 : index
    %c0_6 = arith.constant 0 : index
    %c0_7 = arith.constant 0 : index
    %6 = vector.load %arg4[%c0_5, %c0_6, %c0_7] : memref<2x1x8xf32, #tpu.memory_space<vmem>>, vector<2x1x8xf32>
    %7 = vector.broadcast %6 : vector<2x1x8xf32> to vector<2x8x8xf32>
    %8 = arith.addf %5, %7 : vector<2x8x8xf32>
    %c0_8 = arith.constant 0 : index
    %c0_9 = arith.constant 0 : index
    %c0_10 = arith.constant 0 : index
    %9 = vector.load %arg5[%c0_8, %c0_9, %c0_10] : memref<2x128x8xbf16, #tpu.memory_space<vmem>>, vector<2x128x8xbf16>
    "tpu.trace_start"() <{level = 10 : i32, message = "hcd,hdq->hcq"}> : () -> ()
    %cst_11 = arith.constant dense<0.000000e+00> : vector<2x8x8xf32>
    %10 = tpu.matmul %3, %9, %cst_11 {dimension_numbers = #tpu.dot_dimension_numbers<[2], [1], [1], [2], [0, 0, 0, 1, 1, 2], [0], [0]>} : vector<2x8x128xbf16>, vector<2x128x8xbf16>, vector<2x8x8xf32> -> vector<2x8x8xf32>
    "tpu.trace_stop"() : () -> ()
    %c0_12 = arith.constant 0 : index
    %c0_13 = arith.constant 0 : index
    %c0_14 = arith.constant 0 : index
    %11 = vector.load %arg6[%c0_12, %c0_13, %c0_14] : memref<2x1x8xf32, #tpu.memory_space<vmem>>, vector<2x1x8xf32>
    %12 = vector.broadcast %11 : vector<2x1x8xf32> to vector<2x8x8xf32>
    %13 = arith.addf %10, %12 : vector<2x8x8xf32>
    %c0_15 = arith.constant 0 : index
    %c0_16 = arith.constant 0 : index
    %c0_17 = arith.constant 0 : index
    %14 = vector.load %arg7[%c0_15, %c0_16, %c0_17] : memref<2x128x8xbf16, #tpu.memory_space<vmem>>, vector<2x128x8xbf16>
    "tpu.trace_start"() <{level = 10 : i32, message = "hcd,hdv->hcv"}> : () -> ()
    %cst_18 = arith.constant dense<0.000000e+00> : vector<2x8x8xf32>
    %15 = tpu.matmul %3, %14, %cst_18 {dimension_numbers = #tpu.dot_dimension_numbers<[2], [1], [1], [2], [0, 0, 0, 1, 1, 2], [0], [0]>} : vector<2x8x128xbf16>, vector<2x128x8xbf16>, vector<2x8x8xf32> -> vector<2x8x8xf32>
    "tpu.trace_stop"() : () -> ()
    %c0_19 = arith.constant 0 : index
    %c0_20 = arith.constant 0 : index
    %c0_21 = arith.constant 0 : index
    %16 = vector.load %arg8[%c0_19, %c0_20, %c0_21] : memref<2x1x8xf32, #tpu.memory_space<vmem>>, vector<2x1x8xf32>
    %17 = vector.broadcast %16 : vector<2x1x8xf32> to vector<2x8x8xf32>
    %18 = arith.addf %15, %17 : vector<2x8x8xf32>
    %19 = arith.truncf %8 : vector<2x8x8xf32> to vector<2x8x8xbf16>
    %20 = arith.truncf %13 : vector<2x8x8xf32> to vector<2x8x8xbf16>
    "tpu.trace_start"() <{level = 10 : i32, message = "hiq,hjq->hij"}> : () -> ()
    %cst_22 = arith.constant dense<0.000000e+00> : vector<2x8x8xf32>
    %21 = tpu.matmul %19, %20, %cst_22 {dimension_numbers = #tpu.dot_dimension_numbers<[2], [2], [1], [1], [0, 0, 0, 1, 1, 1], [0], [0]>} : vector<2x8x8xbf16>, vector<2x8x8xbf16>, vector<2x8x8xf32> -> vector<2x8x8xf32>
    "tpu.trace_stop"() : () -> ()
    %cst_23 = arith.constant 0.353553385 : f32
    %22 = vector.broadcast %cst_23 : f32 to vector<2x8x8xf32>
    %23 = arith.mulf %21, %22 : vector<2x8x8xf32>
    %cst_24 = arith.constant dense<0xFF800000> : vector<2x8xf32>
    %24 = vector.multi_reduction <maximumf>, %23, %cst_24 [2] : vector<2x8x8xf32> to vector<2x8xf32>
    %25 = vector.shape_cast %24 : vector<2x8xf32> to vector<2x8x1xf32>
    %26 = vector.broadcast %25 : vector<2x8x1xf32> to vector<2x8x8xf32>
    %27 = arith.subf %23, %26 : vector<2x8x8xf32>
    %28 = math.exp %27 : vector<2x8x8xf32>
    %cst_25 = arith.constant dense<0.000000e+00> : vector<2x8xf32>
    %29 = vector.multi_reduction <add>, %28, %cst_25 [2] : vector<2x8x8xf32> to vector<2x8xf32>
    %30 = vector.shape_cast %29 : vector<2x8xf32> to vector<2x8x1xf32>
    %31 = tpu.reciprocal %30 {approx = true} : vector<2x8x1xf32> -> vector<2x8x1xf32>
    %32 = vector.broadcast %31 : vector<2x8x1xf32> to vector<2x8x8xf32>
    %33 = arith.mulf %28, %32 : vector<2x8x8xf32>
    %34 = arith.truncf %33 : vector<2x8x8xf32> to vector<2x8x8xbf16>
    %35 = arith.truncf %18 : vector<2x8x8xf32> to vector<2x8x8xbf16>
    "tpu.trace_start"() <{level = 10 : i32, message = "hij,hjv->hiv"}> : () -> ()
    %cst_26 = arith.constant dense<0.000000e+00> : vector<2x8x8xf32>
    %36 = tpu.matmul %34, %35, %cst_26 {dimension_numbers = #tpu.dot_dimension_numbers<[2], [1], [1], [2], [0, 0, 0, 1, 1, 2], [0], [0]>} : vector<2x8x8xbf16>, vector<2x8x8xbf16>, vector<2x8x8xf32> -> vector<2x8x8xf32>
    "tpu.trace_stop"() : () -> ()
    %37 = arith.truncf %36 : vector<2x8x8xf32> to vector<2x8x8xbf16>
    %c0_27 = arith.constant 0 : index
    %c0_28 = arith.constant 0 : index
    %c0_29 = arith.constant 0 : index
    %38 = vector.load %arg9[%c0_27, %c0_28, %c0_29] : memref<2x8x128xbf16, #tpu.memory_space<vmem>>, vector<2x8x128xbf16>
    "tpu.trace_start"() <{level = 10 : i32, message = "hiv,hvd->hid"}> : () -> ()
    %cst_30 = arith.constant dense<0.000000e+00> : vector<2x8x128xf32>
    %39 = tpu.matmul %37, %38, %cst_30 {dimension_numbers = #tpu.dot_dimension_numbers<[2], [1], [1], [2], [0, 0, 0, 1, 1, 2], [0], [0]>} : vector<2x8x8xbf16>, vector<2x8x128xbf16>, vector<2x8x128xf32> -> vector<2x8x128xf32>
    "tpu.trace_stop"() : () -> ()
    %cst_31 = arith.constant dense<0.000000e+00> : vector<8x128xf32>
    %40 = vector.multi_reduction <add>, %39, %cst_31 [0] : vector<2x8x128xf32> to vector<8x128xf32>
    %c0_32 = arith.constant 0 : index
    %c0_33 = arith.constant 0 : index
    %41 = vector.load %arg10[%c0_32, %c0_33] : memref<1x128xf32, #tpu.memory_space<vmem>>, vector<1x128xf32>
    %42 = vector.broadcast %41 : vector<1x128xf32> to vector<8x128xf32>
    %43 = arith.addf %40, %42 : vector<8x128xf32>
    %44 = arith.extf %1 : vector<8x128xbf16> to vector<8x128xf32>
    %45 = arith.addf %43, %44 : vector<8x128xf32>
    %c0_34 = arith.constant 0 : index
    %c0_35 = arith.constant 0 : index
    %46 = vector.load %arg11[%c0_34, %c0_35] : memref<1x128xf32, #tpu.memory_space<vmem>>, vector<1x128xf32>
    %c0_36 = arith.constant 0 : index
    %c0_37 = arith.constant 0 : index
    %47 = vector.load %arg12[%c0_36, %c0_37] : memref<1x128xf32, #tpu.memory_space<vmem>>, vector<1x128xf32>
    %cst_38 = arith.constant dense<0.000000e+00> : vector<8xf32>
    %48 = vector.multi_reduction <add>, %45, %cst_38 [1] : vector<8x128xf32> to vector<8xf32>
    %49 = vector.shape_cast %48 : vector<8xf32> to vector<8x1xf32>
    %cst_39 = arith.constant 1.280000e+02 : f32
    %50 = vector.broadcast %cst_39 : f32 to vector<8x1xf32>
    %51 = arith.divf %49, %50 : vector<8x1xf32>
    %52 = vector.broadcast %51 : vector<8x1xf32> to vector<8x128xf32>
    %53 = arith.subf %45, %52 : vector<8x128xf32>
    %54 = arith.mulf %53, %53 : vector<8x128xf32>
    %cst_40 = arith.constant dense<0.000000e+00> : vector<8xf32>
    %55 = vector.multi_reduction <add>, %54, %cst_40 [1] : vector<8x128xf32> to vector<8xf32>
    %56 = vector.shape_cast %55 : vector<8xf32> to vector<8x1xf32>
    %cst_41 = arith.constant 1.280000e+02 : f32
    %57 = vector.broadcast %cst_41 : f32 to vector<8x1xf32>
    %58 = arith.divf %56, %57 : vector<8x1xf32>
    %59 = vector.broadcast %51 : vector<8x1xf32> to vector<8x128xf32>
    %60 = arith.subf %45, %59 : vector<8x128xf32>
    %cst_42 = arith.constant 9.99999974E-6 : f32
    %61 = vector.broadcast %cst_42 : f32 to vector<8x1xf32>
    %62 = arith.addf %58, %61 : vector<8x1xf32>
    %63 = math.rsqrt %62 : vector<8x1xf32>
    %64 = vector.broadcast %63 : vector<8x1xf32> to vector<8x128xf32>
    %65 = arith.mulf %60, %64 : vector<8x128xf32>
    %66 = vector.broadcast %46 : vector<1x128xf32> to vector<8x128xf32>
    %67 = arith.mulf %65, %66 : vector<8x128xf32>
    %68 = vector.broadcast %47 : vector<1x128xf32> to vector<8x128xf32>
    %69 = arith.addf %67, %68 : vector<8x128xf32>
    %70 = arith.truncf %69 : vector<8x128xf32> to vector<8x128xbf16>
    %c0_43 = arith.constant 0 : index
    %c0_44 = arith.constant 0 : index
    %71 = vector.load %arg13[%c0_43, %c0_44] : memref<128x256xbf16, #tpu.memory_space<vmem>>, vector<128x256xbf16>
    %cst_45 = arith.constant dense<0.000000e+00> : vector<8x256xf32>
    %72 = tpu.matmul %70, %71, %cst_45 {dimension_numbers = #tpu.dot_dimension_numbers<[1], [0], [0], [1], [0, 0, 1, 1], [], []>} : vector<8x128xbf16>, vector<128x256xbf16>, vector<8x256xf32> -> vector<8x256xf32>
    %c0_46 = arith.constant 0 : index
    %c0_47 = arith.constant 0 : index
    %73 = vector.load %arg14[%c0_46, %c0_47] : memref<1x256xf32, #tpu.memory_space<vmem>>, vector<1x256xf32>
    %74 = vector.broadcast %73 : vector<1x256xf32> to vector<8x256xf32>
    %75 = arith.addf %72, %74 : vector<8x256xf32>
    %cst_48 = arith.constant 0.000000e+00 : f32
    %76 = vector.broadcast %cst_48 : f32 to vector<8x256xf32>
    %77 = arith.maximumf %75, %76 : vector<8x256xf32>
    %78 = arith.truncf %77 : vector<8x256xf32> to vector<8x256xbf16>
    %c0_49 = arith.constant 0 : index
    %c0_50 = arith.constant 0 : index
    %79 = vector.load %arg15[%c0_49, %c0_50] : memref<256x128xbf16, #tpu.memory_space<vmem>>, vector<256x128xbf16>
    %cst_51 = arith.constant dense<0.000000e+00> : vector<8x128xf32>
    %80 = tpu.matmul %78, %79, %cst_51 {dimension_numbers = #tpu.dot_dimension_numbers<[1], [0], [0], [1], [0, 0, 1, 1], [], []>} : vector<8x256xbf16>, vector<256x128xbf16>, vector<8x128xf32> -> vector<8x128xf32>
    %c0_52 = arith.constant 0 : index
    %c0_53 = arith.constant 0 : index
    %81 = vector.load %arg16[%c0_52, %c0_53] : memref<1x128xf32, #tpu.memory_space<vmem>>, vector<1x128xf32>
    %82 = vector.broadcast %81 : vector<1x128xf32> to vector<8x128xf32>
    %83 = arith.addf %80, %82 : vector<8x128xf32>
    %84 = arith.addf %83, %69 : vector<8x128xf32>
    %c0_54 = arith.constant 0 : index
    %c0_55 = arith.constant 0 : index
    %85 = vector.load %arg17[%c0_54, %c0_55] : memref<1x128xf32, #tpu.memory_space<vmem>>, vector<1x128xf32>
    %c0_56 = arith.constant 0 : index
    %c0_57 = arith.constant 0 : index
    %86 = vector.load %arg18[%c0_56, %c0_57] : memref<1x128xf32, #tpu.memory_space<vmem>>, vector<1x128xf32>
    %cst_58 = arith.constant dense<0.000000e+00> : vector<8xf32>
    %87 = vector.multi_reduction <add>, %84, %cst_58 [1] : vector<8x128xf32> to vector<8xf32>
    %88 = vector.shape_cast %87 : vector<8xf32> to vector<8x1xf32>
    %cst_59 = arith.constant 1.280000e+02 : f32
    %89 = vector.broadcast %cst_59 : f32 to vector<8x1xf32>
    %90 = arith.divf %88, %89 : vector<8x1xf32>
    %91 = vector.broadcast %90 : vector<8x1xf32> to vector<8x128xf32>
    %92 = arith.subf %84, %91 : vector<8x128xf32>
    %93 = arith.mulf %92, %92 : vector<8x128xf32>
    %cst_60 = arith.constant dense<0.000000e+00> : vector<8xf32>
    %94 = vector.multi_reduction <add>, %93, %cst_60 [1] : vector<8x128xf32> to vector<8xf32>
    %95 = vector.shape_cast %94 : vector<8xf32> to vector<8x1xf32>
    %cst_61 = arith.constant 1.280000e+02 : f32
    %96 = vector.broadcast %cst_61 : f32 to vector<8x1xf32>
    %97 = arith.divf %95, %96 : vector<8x1xf32>
    %98 = vector.broadcast %90 : vector<8x1xf32> to vector<8x128xf32>
    %99 = arith.subf %84, %98 : vector<8x128xf32>
    %cst_62 = arith.constant 9.99999974E-6 : f32
    %100 = vector.broadcast %cst_62 : f32 to vector<8x1xf32>
    %101 = arith.addf %97, %100 : vector<8x1xf32>
    %102 = math.rsqrt %101 : vector<8x1xf32>
    %103 = vector.broadcast %102 : vector<8x1xf32> to vector<8x128xf32>
    %104 = arith.mulf %99, %103 : vector<8x128xf32>
    %105 = vector.broadcast %85 : vector<1x128xf32> to vector<8x128xf32>
    %106 = arith.mulf %104, %105 : vector<8x128xf32>
    %107 = vector.broadcast %86 : vector<1x128xf32> to vector<8x128xf32>
    %108 = arith.addf %106, %107 : vector<8x128xf32>
    %c0_63 = arith.constant 0 : index
    %c0_64 = arith.constant 0 : index
    %c0_65 = arith.constant 0 : index
    %109 = vector.load %arg19[%c0_63, %c0_64, %c0_65] : memref<1x8x128xf32, #tpu.memory_space<vmem>>, vector<1x8x128xf32>
    %110 = vector.shape_cast %109 : vector<1x8x128xf32> to vector<8x128xf32>
    %111 = vector.shape_cast %108 : vector<8x128xf32> to vector<1x8x128xf32>
    tpu.vector_store %arg19[%c0_63, %c0_64, %c0_65], %111 {strides = array<i32>} : memref<1x8x128xf32, #tpu.memory_space<vmem>>, vector<1x8x128xf32>,
    return
  }
  func.func @transform_0(%arg0: i32, %arg1: i32) -> (i32, i32, i32) {
    %c0_i32 = arith.constant 0 : i32
    %c0_i32_0 = arith.constant 0 : i32
    return %arg0, %arg1, %c0_i32 : i32, i32, i32
  }
  func.func @transform_1(%arg0: i32, %arg1: i32) -> (i32, i32, i32) {
    %c0_i32 = arith.constant 0 : i32
    %c0_i32_0 = arith.constant 0 : i32
    %c0_i32_1 = arith.constant 0 : i32
    %c0_i32_2 = arith.constant 0 : i32
    return %c0_i32, %c0_i32_0, %c0_i32_1 : i32, i32, i32
  }
  func.func @transform_2(%arg0: i32, %arg1: i32) -> (i32, i32, i32) {
    %c0_i32 = arith.constant 0 : i32
    %c0_i32_0 = arith.constant 0 : i32
    %c0_i32_1 = arith.constant 0 : i32
    %c0_i32_2 = arith.constant 0 : i32
    return %c0_i32, %c0_i32_0, %c0_i32_1 : i32, i32, i32
  }
  func.func @transform_3(%arg0: i32, %arg1: i32) -> (i32, i32, i32) {
    %c0_i32 = arith.constant 0 : i32
    %c0_i32_0 = arith.constant 0 : i32
    %c0_i32_1 = arith.constant 0 : i32
    %c0_i32_2 = arith.constant 0 : i32
    return %c0_i32, %c0_i32_0, %c0_i32_1 : i32, i32, i32
  }
  func.func @transform_4(%arg0: i32, %arg1: i32) -> (i32, i32, i32) {
    %c0_i32 = arith.constant 0 : i32
    %c0_i32_0 = arith.constant 0 : i32
    %c0_i32_1 = arith.constant 0 : i32
    %c0_i32_2 = arith.constant 0 : i32
    return %c0_i32, %c0_i32_0, %c0_i32_1 : i32, i32, i32
  }
  func.func @transform_5(%arg0: i32, %arg1: i32) -> (i32, i32, i32) {
    %c0_i32 = arith.constant 0 : i32
    %c0_i32_0 = arith.constant 0 : i32
    %c0_i32_1 = arith.constant 0 : i32
    %c0_i32_2 = arith.constant 0 : i32
    return %c0_i32, %c0_i32_0, %c0_i32_1 : i32, i32, i32
  }
  func.func @transform_6(%arg0: i32, %arg1: i32) -> (i32, i32, i32) {
    %c0_i32 = arith.constant 0 : i32
    %c0_i32_0 = arith.constant 0 : i32
    %c0_i32_1 = arith.constant 0 : i32
    %c0_i32_2 = arith.constant 0 : i32
    return %c0_i32, %c0_i32_0, %c0_i32_1 : i32, i32, i32
  }
  func.func @transform_7(%arg0: i32, %arg1: i32) -> (i32, i32, i32) {
    %c0_i32 = arith.constant 0 : i32
    %c0_i32_0 = arith.constant 0 : i32
    %c0_i32_1 = arith.constant 0 : i32
    %c0_i32_2 = arith.constant 0 : i32
    return %c0_i32, %c0_i32_0, %c0_i32_1 : i32, i32, i32
  }
  func.func @transform_8(%arg0: i32, %arg1: i32) -> (i32, i32) {
    %c0_i32 = arith.constant 0 : i32
    %c0_i32_0 = arith.constant 0 : i32
    %c0_i32_1 = arith.constant 0 : i32
    return %c0_i32, %c0_i32_0 : i32, i32
  }
  func.func @transform_9(%arg0: i32, %arg1: i32) -> (i32, i32) {
    %c0_i32 = arith.constant 0 : i32
    %c0_i32_0 = arith.constant 0 : i32
    %c0_i32_1 = arith.constant 0 : i32
    return %c0_i32, %c0_i32_0 : i32, i32
  }
  func.func @transform_10(%arg0: i32, %arg1: i32) -> (i32, i32) {
    %c0_i32 = arith.constant 0 : i32
    %c0_i32_0 = arith.constant 0 : i32
    %c0_i32_1 = arith.constant 0 : i32
    return %c0_i32, %c0_i32_0 : i32, i32
  }
  func.func @transform_11(%arg0: i32, %arg1: i32) -> (i32, i32) {
    %c0_i32 = arith.constant 0 : i32
    %c0_i32_0 = arith.constant 0 : i32
    %c0_i32_1 = arith.constant 0 : i32
    return %c0_i32, %c0_i32_0 : i32, i32
  }
  func.func @transform_12(%arg0: i32, %arg1: i32) -> (i32, i32) {
    %c0_i32 = arith.constant 0 : i32
    %c0_i32_0 = arith.constant 0 : i32
    %c0_i32_1 = arith.constant 0 : i32
    return %c0_i32, %c0_i32_0 : i32, i32
  }
  func.func @transform_13(%arg0: i32, %arg1: i32) -> (i32, i32) {
    %c0_i32 = arith.constant 0 : i32
    %c0_i32_0 = arith.constant 0 : i32
    %c0_i32_1 = arith.constant 0 : i32
    return %c0_i32, %c0_i32_0 : i32, i32
  }
  func.func @transform_14(%arg0: i32, %arg1: i32) -> (i32, i32) {
    %c0_i32 = arith.constant 0 : i32
    %c0_i32_0 = arith.constant 0 : i32
    %c0_i32_1 = arith.constant 0 : i32
    return %c0_i32, %c0_i32_0 : i32, i32
  }
  func.func @transform_15(%arg0: i32, %arg1: i32) -> (i32, i32) {
    %c0_i32 = arith.constant 0 : i32
    %c0_i32_0 = arith.constant 0 : i32
    %c0_i32_1 = arith.constant 0 : i32
    return %c0_i32, %c0_i32_0 : i32, i32
  }
  func.func @transform_16(%arg0: i32, %arg1: i32) -> (i32, i32) {
    %c0_i32 = arith.constant 0 : i32
    %c0_i32_0 = arith.constant 0 : i32
    %c0_i32_1 = arith.constant 0 : i32
    return %c0_i32, %c0_i32_0 : i32, i32
  }
  func.func @transform_17(%arg0: i32, %arg1: i32) -> (i32, i32, i32) {
    %c0_i32 = arith.constant 0 : i32
    %c0_i32_0 = arith.constant 0 : i32
    return %arg0, %arg1, %c0_i32 : i32, i32, i32
  }
}

</mosaic_0001>

<llo_original>
// kernel: tpu_custom_call.1
$region0: #{tpu_custom_call.1}
  #allocation0 [shape = 'u32[]', space=smem, size = 0x4, offset = 0x4, fixed_abs, tag = 'smem constant byte address 0x4 - core index']
  #allocation1 [shape = 'u32[144,128]{1,0:T(1,128)}', space=vmem, size = 0x12000, scoped, tag = 'internal scratch']
  %s0 = inlined_call_operand.vmem [shape: bf16[2,16,128], index: 0, kind: input, shape index: {}]
  %s1 = inlined_call_operand.vmem [shape: bf16[2,128,8], index: 1, kind: input, shape index: {}]
  %s2 = inlined_call_operand.vmem [shape: f32[2,1,8], index: 2, kind: input, shape index: {}]
  %s3 = inlined_call_operand.vmem [shape: bf16[2,128,8], index: 3, kind: input, shape index: {}]
  %s4 = inlined_call_operand.vmem [shape: f32[2,1,8], index: 4, kind: input, shape index: {}]
  %s5 = inlined_call_operand.vmem [shape: bf16[2,128,8], index: 5, kind: input, shape index: {}]
  %s6 = inlined_call_operand.vmem [shape: f32[2,1,8], index: 6, kind: input, shape index: {}]
  %s7 = inlined_call_operand.vmem [shape: bf16[2,8,128], index: 7, kind: input, shape index: {}]
  %s8 = inlined_call_operand.vmem [shape: f32[1,128], index: 8, kind: input, shape index: {}]
  %s9 = inlined_call_operand.vmem [shape: f32[1,128], index: 9, kind: input, shape index: {}]
  %s10 = inlined_call_operand.vmem [shape: f32[1,128], index: 10, kind: input, shape index: {}]
  %s11 = inlined_call_operand.vmem [shape: bf16[128,256], index: 11, kind: input, shape index: {}]
  %s12 = inlined_call_operand.vmem [shape: f32[1,256], index: 12, kind: input, shape index: {}]
  %s13 = inlined_call_operand.vmem [shape: bf16[256,128], index: 13, kind: input, shape index: {}]
  %s14 = inlined_call_operand.vmem [shape: f32[1,128], index: 14, kind: input, shape index: {}]
  %s15 = inlined_call_operand.vmem [shape: f32[1,128], index: 15, kind: input, shape index: {}]
  %s16 = inlined_call_operand.vmem [shape: f32[1,128], index: 16, kind: input, shape index: {}]
  %s17 = inlined_call_operand.hbm [shape: f32[2,16,128], index: 17, kind: output, shape index: {}]
  %s18 = sld [smem:[#allocation0]]
  $region101: #{tpu_custom_call.1} parent=0
    _
  %s20 = ssub.s32 1, %s18
  %s21 = scalar_select 0, %s20, %s18
  $region1: #{tpu_custom_call.1} parent=0
    #allocation2 [shape = 'u8[8192]{0}', space=vmem, size = 0x2000, scoped, tag = 'output window, operand 0']
    #allocation3 [shape = 's32[2]{0}', space=sflag, size = 0x8, scoped, tag = 'scoped memory for tpu_custom_call.1']
    %22 = vsyncpa [#allocation3], 0
    %s23 = scalar_lea.sflag [#allocation3], 1
    %24 = vsyncpa %s23, 0
    loop: start=0, step=1, limit=6
    $region2: #{tpu_custom_call.1} parent=1 // loop_pre_header
      _
    $region3: #{tpu_custom_call.1} parent=1 // loop_header
      %s26 = sphi 0, %s30
      %p27 = scmp.ge.s32.totalorder %s26, 6
      %s33 = sphi 0, %s45
      %s34 = sphi 0, %s41
      %s35 = sphi 0, %s33
      %s36 = sphi 0, %s34
      %s37 = sphi 0, %s35
      %s38 = sphi 0, %s36
      %s50 = sphi 0, %s52
      %s53 = sphi 0, %s50
      %s54 = sphi 0, %s53
      %s70 = sphi 0, %s54
      %s74 = sphi 0, %s74
      %s76 = sphi 0, %s74
      %s77 = sphi 0, %s76
      %s91 = sphi 0, %s77
      %s95 = sphi 0, %s95
      %s97 = sphi 0, %s95
      %s98 = sphi 0, %s97
      %s112 = sphi 0, %s98
      %s116 = sphi 0, %s116
      %s118 = sphi 0, %s116
      %s119 = sphi 0, %s118
      %s133 = sphi 0, %s119
      %s137 = sphi 0, %s137
      %s139 = sphi 0, %s137
      %s140 = sphi 0, %s139
      %s154 = sphi 0, %s140
      %s158 = sphi 0, %s158
      %s160 = sphi 0, %s158
      %s161 = sphi 0, %s160
      %s175 = sphi 0, %s161
      %s179 = sphi 0, %s179
      %s181 = sphi 0, %s179
      %s182 = sphi 0, %s181
      %s196 = sphi 0, %s182
      %s200 = sphi 0, %s200
      %s202 = sphi 0, %s200
      %s203 = sphi 0, %s202
      %s217 = sphi 0, %s203
      %s221 = sphi 0, %s221
      %s223 = sphi 0, %s221
      %s224 = sphi 0, %s223
      %s238 = sphi 0, %s224
      %s242 = sphi 0, %s242
      %s244 = sphi 0, %s242
      %s245 = sphi 0, %s244
      %s259 = sphi 0, %s245
      %s263 = sphi 0, %s263
      %s265 = sphi 0, %s263
      %s266 = sphi 0, %s265
      %s280 = sphi 0, %s266
      %s284 = sphi 0, %s284
      %s286 = sphi 0, %s284
      %s287 = sphi 0, %s286
      %s301 = sphi 0, %s287
      %s305 = sphi 0, %s305
      %s307 = sphi 0, %s305
      %s308 = sphi 0, %s307
      %s322 = sphi 0, %s308
      %s326 = sphi 0, %s326
      %s328 = sphi 0, %s326
      %s329 = sphi 0, %s328
      %s343 = sphi 0, %s329
      %s347 = sphi 0, %s347
      %s349 = sphi 0, %s347
      %s350 = sphi 0, %s349
      %s364 = sphi 0, %s350
      %s368 = sphi 0, %s368
      %s370 = sphi 0, %s368
      %s371 = sphi 0, %s370
      %s385 = sphi 0, %s371
      %s389 = sphi 0, %s389
      %s391 = sphi 0, %s389
      %s392 = sphi 0, %s391
      %s406 = sphi 0, %s392
      %s414 = sphi 0, %s416
      %s417 = sphi 0, %s414
      %s418 = sphi 0, %s417
      %s434 = sphi 0, %s418
    $region4: #{tpu_custom_call.1} parent=1 // loop_header_branch
      %29 = sbr.rel (%p27) target = $region8
    $region5: #{tpu_custom_call.1} parent=1 // loop_body
      %s31 = ssub.s32 %s26, 1
      %s32 = ssub.s32 %s26, 2
      %s39 = sadd.s32 1, %s34
      %p40 = scmp.ge.s32.totalorder %s39, 2
      %s41 = scalar_select %p40, 0, %s39
      %s42 = sadd.s32 1, %s33
      %s43 = scalar_select %p40, %s42, %s33
      %p44 = scmp.ge.s32.totalorder %s43, 2
      %s45 = scalar_select %p44, 0, %s43
      %s46 = ssub.s32 %s33, %s45
      %s47 = ssub.s32 %s34, %s41
      %s48 = sor.u32 %s46, %s47
      %p49 = scmp.eq.s32.totalorder %s48, 0
      %s51 = sadd.s32 %s50, 1
      %s52 = scalar_select %p49, %s50, %s51
      %p55 = pneg %p49
      %p56 = scmp.eq.s32.totalorder %s26, 3
      %p57 = por %p55, %p56
      %p58 = scmp.ne.s32.totalorder %s50, %s53
      %p59 = scmp.eq.s32.totalorder %s26, 0
      %p60 = por %p58, %p59
      %p61 = scmp.ne.s32.totalorder %s50, %s53
      %p62 = scmp.eq.s32.totalorder %s31, 3
      %p63 = por %p61, %p62
      %p64 = scmp.ne.s32.totalorder %s53, %s54
      %p65 = scmp.eq.s32.totalorder %s31, 0
      %p66 = por %p64, %p65
      %p67 = scmp.ne.s32.totalorder %s53, %s54
      %p68 = scmp.eq.s32.totalorder %s32, 3
      %p69 = por %p67, %p68
      %p71 = scmp.ne.s32.totalorder %s54, %s70
      %p72 = scmp.eq.s32.totalorder %s32, 0
      %p73 = por %p71, %p72
      %s75 = sadd.s32 %s74, 1
      %p78 = scmp.eq.s32.totalorder %s26, 3
      %p79 = scmp.ne.s32.totalorder %s74, %s76
      %p80 = scmp.eq.s32.totalorder %s26, 0
      %p81 = por %p79, %p80
      %p82 = scmp.ne.s32.totalorder %s74, %s76
      %p83 = scmp.eq.s32.totalorder %s31, 3
      %p84 = por %p82, %p83
      %p85 = scmp.ne.s32.totalorder %s76, %s77
      %p86 = scmp.eq.s32.totalorder %s31, 0
      %p87 = por %p85, %p86
      %p88 = scmp.ne.s32.totalorder %s76, %s77
      %p89 = scmp.eq.s32.totalorder %s32, 3
      %p90 = por %p88, %p89
      %p92 = scmp.ne.s32.totalorder %s77, %s91
      %p93 = scmp.eq.s32.totalorder %s32, 0
      %p94 = por %p92, %p93
      %s96 = sadd.s32 %s95, 1
      %p99 = scmp.eq.s32.totalorder %s26, 3
      %p100 = scmp.ne.s32.totalorder %s95, %s97
      %p101 = scmp.eq.s32.totalorder %s26, 0
      %p102 = por %p100, %p101
      %p103 = scmp.ne.s32.totalorder %s95, %s97
      %p104 = scmp.eq.s32.totalorder %s31, 3
      %p105 = por %p103, %p104
      %p106 = scmp.ne.s32.totalorder %s97, %s98
      %p107 = scmp.eq.s32.totalorder %s31, 0
      %p108 = por %p106, %p107
      %p109 = scmp.ne.s32.totalorder %s97, %s98
      %p110 = scmp.eq.s32.totalorder %s32, 3
      %p111 = por %p109, %p110
      %p113 = scmp.ne.s32.totalorder %s98, %s112
      %p114 = scmp.eq.s32.totalorder %s32, 0
      %p115 = por %p113, %p114
      %s117 = sadd.s32 %s116, 1
      %p120 = scmp.eq.s32.totalorder %s26, 3
      %p121 = scmp.ne.s32.totalorder %s116, %s118
      %p122 = scmp.eq.s32.totalorder %s26, 0
      %p123 = por %p121, %p122
      %p124 = scmp.ne.s32.totalorder %s116, %s118
      %p125 = scmp.eq.s32.totalorder %s31, 3
      %p126 = por %p124, %p125
      %p127 = scmp.ne.s32.totalorder %s118, %s119
      %p128 = scmp.eq.s32.totalorder %s31, 0
      %p129 = por %p127, %p128
      %p130 = scmp.ne.s32.totalorder %s118, %s119
      %p131 = scmp.eq.s32.totalorder %s32, 3
      %p132 = por %p130, %p131
      %p134 = scmp.ne.s32.totalorder %s119, %s133
      %p135 = scmp.eq.s32.totalorder %s32, 0
      %p136 = por %p134, %p135
      %s138 = sadd.s32 %s137, 1
      %p141 = scmp.eq.s32.totalorder %s26, 3
      %p142 = scmp.ne.s32.totalorder %s137, %s139
      %p143 = scmp.eq.s32.totalorder %s26, 0
      %p144 = por %p142, %p143
      %p145 = scmp.ne.s32.totalorder %s137, %s139
      %p146 = scmp.eq.s32.totalorder %s31, 3
      %p147 = por %p145, %p146
      %p148 = scmp.ne.s32.totalorder %s139, %s140
      %p149 = scmp.eq.s32.totalorder %s31, 0
      %p150 = por %p148, %p149
      %p151 = scmp.ne.s32.totalorder %s139, %s140
      %p152 = scmp.eq.s32.totalorder %s32, 3
      %p153 = por %p151, %p152
      %p155 = scmp.ne.s32.totalorder %s140, %s154
      %p156 = scmp.eq.s32.totalorder %s32, 0
      %p157 = por %p155, %p156
      %s159 = sadd.s32 %s158, 1
      %p162 = scmp.eq.s32.totalorder %s26, 3
      %p163 = scmp.ne.s32.totalorder %s158, %s160
      %p164 = scmp.eq.s32.totalorder %s26, 0
      %p165 = por %p163, %p164
      %p166 = scmp.ne.s32.totalorder %s158, %s160
      %p167 = scmp.eq.s32.totalorder %s31, 3
      %p168 = por %p166, %p167
      %p169 = scmp.ne.s32.totalorder %s160, %s161
      %p170 = scmp.eq.s32.totalorder %s31, 0
      %p171 = por %p169, %p170
      %p172 = scmp.ne.s32.totalorder %s160, %s161
      %p173 = scmp.eq.s32.totalorder %s32, 3
      %p174 = por %p172, %p173
      %p176 = scmp.ne.s32.totalorder %s161, %s175
      %p177 = scmp.eq.s32.totalorder %s32, 0
      %p178 = por %p176, %p177
      %s180 = sadd.s32 %s179, 1
      %p183 = scmp.eq.s32.totalorder %s26, 3
      %p184 = scmp.ne.s32.totalorder %s179, %s181
      %p185 = scmp.eq.s32.totalorder %s26, 0
      %p186 = por %p184, %p185
      %p187 = scmp.ne.s32.totalorder %s179, %s181
      %p188 = scmp.eq.s32.totalorder %s31, 3
      %p189 = por %p187, %p188
      %p190 = scmp.ne.s32.totalorder %s181, %s182
      %p191 = scmp.eq.s32.totalorder %s31, 0
      %p192 = por %p190, %p191
      %p193 = scmp.ne.s32.totalorder %s181, %s182
      %p194 = scmp.eq.s32.totalorder %s32, 3
      %p195 = por %p193, %p194
      %p197 = scmp.ne.s32.totalorder %s182, %s196
      %p198 = scmp.eq.s32.totalorder %s32, 0
      %p199 = por %p197, %p198
      %s201 = sadd.s32 %s200, 1
      %p204 = scmp.eq.s32.totalorder %s26, 3
      %p205 = scmp.ne.s32.totalorder %s200, %s202
      %p206 = scmp.eq.s32.totalorder %s26, 0
      %p207 = por %p205, %p206
      %p208 = scmp.ne.s32.totalorder %s200, %s202
      %p209 = scmp.eq.s32.totalorder %s31, 3
      %p210 = por %p208, %p209
      %p211 = scmp.ne.s32.totalorder %s202, %s203
      %p212 = scmp.eq.s32.totalorder %s31, 0
      %p213 = por %p211, %p212
      %p214 = scmp.ne.s32.totalorder %s202, %s203
      %p215 = scmp.eq.s32.totalorder %s32, 3
      %p216 = por %p214, %p215
      %p218 = scmp.ne.s32.totalorder %s203, %s217
      %p219 = scmp.eq.s32.totalorder %s32, 0
      %p220 = por %p218, %p219
      %s222 = sadd.s32 %s221, 1
      %p225 = scmp.eq.s32.totalorder %s26, 3
      %p226 = scmp.ne.s32.totalorder %s221, %s223
      %p227 = scmp.eq.s32.totalorder %s26, 0
      %p228 = por %p226, %p227
      %p229 = scmp.ne.s32.totalorder %s221, %s223
      %p230 = scmp.eq.s32.totalorder %s31, 3
      %p231 = por %p229, %p230
      %p232 = scmp.ne.s32.totalorder %s223, %s224
      %p233 = scmp.eq.s32.totalorder %s31, 0
      %p234 = por %p232, %p233
      %p235 = scmp.ne.s32.totalorder %s223, %s224
      %p236 = scmp.eq.s32.totalorder %s32, 3
      %p237 = por %p235, %p236
      %p239 = scmp.ne.s32.totalorder %s224, %s238
      %p240 = scmp.eq.s32.totalorder %s32, 0
      %p241 = por %p239, %p240
      %s243 = sadd.s32 %s242, 1
      %p246 = scmp.eq.s32.totalorder %s26, 3
      %p247 = scmp.ne.s32.totalorder %s242, %s244
      %p248 = scmp.eq.s32.totalorder %s26, 0
      %p249 = por %p247, %p248
      %p250 = scmp.ne.s32.totalorder %s242, %s244
      %p251 = scmp.eq.s32.totalorder %s31, 3
      %p252 = por %p250, %p251
      %p253 = scmp.ne.s32.totalorder %s244, %s245
      %p254 = scmp.eq.s32.totalorder %s31, 0
      %p255 = por %p253, %p254
      %p256 = scmp.ne.s32.totalorder %s244, %s245
      %p257 = scmp.eq.s32.totalorder %s32, 3
      %p258 = por %p256, %p257
      %p260 = scmp.ne.s32.totalorder %s245, %s259
      %p261 = scmp.eq.s32.totalorder %s32, 0
      %p262 = por %p260, %p261
      %s264 = sadd.s32 %s263, 1
      %p267 = scmp.eq.s32.totalorder %s26, 3
      %p268 = scmp.ne.s32.totalorder %s263, %s265
      %p269 = scmp.eq.s32.totalorder %s26, 0
      %p270 = por %p268, %p269
      %p271 = scmp.ne.s32.totalorder %s263, %s265
      %p272 = scmp.eq.s32.totalorder %s31, 3
      %p273 = por %p271, %p272
      %p274 = scmp.ne.s32.totalorder %s265, %s266
      %p275 = scmp.eq.s32.totalorder %s31, 0
      %p276 = por %p274, %p275
      %p277 = scmp.ne.s32.totalorder %s265, %s266
      %p278 = scmp.eq.s32.totalorder %s32, 3
      %p279 = por %p277, %p278
      %p281 = scmp.ne.s32.totalorder %s266, %s280
      %p282 = scmp.eq.s32.totalorder %s32, 0
      %p283 = por %p281, %p282
      %s285 = sadd.s32 %s284, 1
      %p288 = scmp.eq.s32.totalorder %s26, 3
      %p289 = scmp.ne.s32.totalorder %s284, %s286
      %p290 = scmp.eq.s32.totalorder %s26, 0
      %p291 = por %p289, %p290
      %p292 = scmp.ne.s32.totalorder %s284, %s286
      %p293 = scmp.eq.s32.totalorder %s31, 3
      %p294 = por %p292, %p293
      %p295 = scmp.ne.s32.totalorder %s286, %s287
      %p296 = scmp.eq.s32.totalorder %s31, 0
      %p297 = por %p295, %p296
      %p298 = scmp.ne.s32.totalorder %s286, %s287
      %p299 = scmp.eq.s32.totalorder %s32, 3
      %p300 = por %p298, %p299
      %p302 = scmp.ne.s32.totalorder %s287, %s301
      %p303 = scmp.eq.s32.totalorder %s32, 0
      %p304 = por %p302, %p303
      %s306 = sadd.s32 %s305, 1
      %p309 = scmp.eq.s32.totalorder %s26, 3
      %p310 = scmp.ne.s32.totalorder %s305, %s307
      %p311 = scmp.eq.s32.totalorder %s26, 0
      %p312 = por %p310, %p311
      %p313 = scmp.ne.s32.totalorder %s305, %s307
      %p314 = scmp.eq.s32.totalorder %s31, 3
      %p315 = por %p313, %p314
      %p316 = scmp.ne.s32.totalorder %s307, %s308
      %p317 = scmp.eq.s32.totalorder %s31, 0
      %p318 = por %p316, %p317
      %p319 = scmp.ne.s32.totalorder %s307, %s308
      %p320 = scmp.eq.s32.totalorder %s32, 3
      %p321 = por %p319, %p320
      %p323 = scmp.ne.s32.totalorder %s308, %s322
      %p324 = scmp.eq.s32.totalorder %s32, 0
      %p325 = por %p323, %p324
      %s327 = sadd.s32 %s326, 1
      %p330 = scmp.eq.s32.totalorder %s26, 3
      %p331 = scmp.ne.s32.totalorder %s326, %s328
      %p332 = scmp.eq.s32.totalorder %s26, 0
      %p333 = por %p331, %p332
      %p334 = scmp.ne.s32.totalorder %s326, %s328
      %p335 = scmp.eq.s32.totalorder %s31, 3
      %p336 = por %p334, %p335
      %p337 = scmp.ne.s32.totalorder %s328, %s329
      %p338 = scmp.eq.s32.totalorder %s31, 0
      %p339 = por %p337, %p338
      %p340 = scmp.ne.s32.totalorder %s328, %s329
      %p341 = scmp.eq.s32.totalorder %s32, 3
      %p342 = por %p340, %p341
      %p344 = scmp.ne.s32.totalorder %s329, %s343
      %p345 = scmp.eq.s32.totalorder %s32, 0
      %p346 = por %p344, %p345
      %s348 = sadd.s32 %s347, 1
      %p351 = scmp.eq.s32.totalorder %s26, 3
      %p352 = scmp.ne.s32.totalorder %s347, %s349
      %p353 = scmp.eq.s32.totalorder %s26, 0
      %p354 = por %p352, %p353
      %p355 = scmp.ne.s32.totalorder %s347, %s349
      %p356 = scmp.eq.s32.totalorder %s31, 3
      %p357 = por %p355, %p356
      %p358 = scmp.ne.s32.totalorder %s349, %s350
      %p359 = scmp.eq.s32.totalorder %s31, 0
      %p360 = por %p358, %p359
      %p361 = scmp.ne.s32.totalorder %s349, %s350
      %p362 = scmp.eq.s32.totalorder %s32, 3
      %p363 = por %p361, %p362
      %p365 = scmp.ne.s32.totalorder %s350, %s364
      %p366 = scmp.eq.s32.totalorder %s32, 0
      %p367 = por %p365, %p366
      %s369 = sadd.s32 %s368, 1
      %p372 = scmp.eq.s32.totalorder %s26, 3
      %p373 = scmp.ne.s32.totalorder %s368, %s370
      %p374 = scmp.eq.s32.totalorder %s26, 0
      %p375 = por %p373, %p374
      %p376 = scmp.ne.s32.totalorder %s368, %s370
      %p377 = scmp.eq.s32.totalorder %s31, 3
      %p378 = por %p376, %p377
      %p379 = scmp.ne.s32.totalorder %s370, %s371
      %p380 = scmp.eq.s32.totalorder %s31, 0
      %p381 = por %p379, %p380
      %p382 = scmp.ne.s32.totalorder %s370, %s371
      %p383 = scmp.eq.s32.totalorder %s32, 3
      %p384 = por %p382, %p383
      %p386 = scmp.ne.s32.totalorder %s371, %s385
      %p387 = scmp.eq.s32.totalorder %s32, 0
      %p388 = por %p386, %p387
      %s390 = sadd.s32 %s389, 1
      %p393 = scmp.eq.s32.totalorder %s26, 3
      %p394 = scmp.ne.s32.totalorder %s389, %s391
      %p395 = scmp.eq.s32.totalorder %s26, 0
      %p396 = por %p394, %p395
      %p397 = scmp.ne.s32.totalorder %s389, %s391
      %p398 = scmp.eq.s32.totalorder %s31, 3
      %p399 = por %p397, %p398
      %p400 = scmp.ne.s32.totalorder %s391, %s392
      %p401 = scmp.eq.s32.totalorder %s31, 0
      %p402 = por %p400, %p401
      %p403 = scmp.ne.s32.totalorder %s391, %s392
      %p404 = scmp.eq.s32.totalorder %s32, 3
      %p405 = por %p403, %p404
      %p407 = scmp.ne.s32.totalorder %s392, %s406
      %p408 = scmp.eq.s32.totalorder %s32, 0
      %p409 = por %p407, %p408
      %s410 = ssub.s32 %s33, %s45
      %s411 = ssub.s32 %s34, %s41
      %s412 = sor.u32 %s410, %s411
      %p413 = scmp.eq.s32.totalorder %s412, 0
      %s415 = sadd.s32 %s414, 1
      %s416 = scalar_select %p413, %s414, %s415
      %p419 = pneg %p413
      %p420 = scmp.eq.s32.totalorder %s26, 3
      %p421 = por %p419, %p420
      %p422 = scmp.ne.s32.totalorder %s414, %s417
      %p423 = scmp.eq.s32.totalorder %s26, 0
      %p424 = por %p422, %p423
      %p425 = scmp.ne.s32.totalorder %s414, %s417
      %p426 = scmp.eq.s32.totalorder %s31, 3
      %p427 = por %p425, %p426
      %p428 = scmp.ne.s32.totalorder %s417, %s418
      %p429 = scmp.eq.s32.totalorder %s31, 0
      %p430 = por %p428, %p429
      %p431 = scmp.ne.s32.totalorder %s417, %s418
      %p432 = scmp.eq.s32.totalorder %s32, 3
      %p433 = por %p431, %p432
      %p435 = scmp.ne.s32.totalorder %s418, %s434
      %p436 = scmp.eq.s32.totalorder %s32, 0
      %p437 = por %p435, %p436
      %p438 = scmp.le.s32.totalorder 1, %s26
      %p439 = scmp.lt.s32.totalorder %s26, 5
      %p440 = pnand %p438, %p439
      %p441 = pneg %p440
      // Predicated region
      $region9: #{tpu_custom_call.1} parent=5 // pred_check
        _
      $region10: #{tpu_custom_call.1} parent=5 // pred_check_branch
        %443 = sbr.rel (%p440) target = $region12
      $region11: #{tpu_custom_call.1} parent=5 // pred_region
        %s444 = ssub.s32 %s26, 1
        // Predicated region
        $region13: #{tpu_custom_call.1} parent=11 // pred_check
          %p445 = pneg %p87
        $region14: #{tpu_custom_call.1} parent=11 // pred_check_branch
          %447 = sbr.rel (%p445) target = $region16
        $region15: #{tpu_custom_call.1} parent=11 // pred_region
          _
        $region16: #{tpu_custom_call.1} parent=11 // pred_fallthru
          _
        // Predicated region
        $region17: #{tpu_custom_call.1} parent=11 // pred_check
          %p448 = pneg %p108
        $region18: #{tpu_custom_call.1} parent=11 // pred_check_branch
          %450 = sbr.rel (%p448) target = $region20
        $region19: #{tpu_custom_call.1} parent=11 // pred_region
          _
        $region20: #{tpu_custom_call.1} parent=11 // pred_fallthru
          _
        // Predicated region
        $region21: #{tpu_custom_call.1} parent=11 // pred_check
          %p451 = pneg %p129
        $region22: #{tpu_custom_call.1} parent=11 // pred_check_branch
          %453 = sbr.rel (%p451) target = $region24
        $region23: #{tpu_custom_call.1} parent=11 // pred_region
          _
        $region24: #{tpu_custom_call.1} parent=11 // pred_fallthru
          _
        // Predicated region
        $region25: #{tpu_custom_call.1} parent=11 // pred_check
          %p454 = pneg %p150
        $region26: #{tpu_custom_call.1} parent=11 // pred_check_branch
          %456 = sbr.rel (%p454) target = $region28
        $region27: #{tpu_custom_call.1} parent=11 // pred_region
          _
        $region28: #{tpu_custom_call.1} parent=11 // pred_fallthru
          _
        // Predicated region
        $region29: #{tpu_custom_call.1} parent=11 // pred_check
          %p457 = pneg %p171
        $region30: #{tpu_custom_call.1} parent=11 // pred_check_branch
          %459 = sbr.rel (%p457) target = $region32
        $region31: #{tpu_custom_call.1} parent=11 // pred_region
          _
        $region32: #{tpu_custom_call.1} parent=11 // pred_fallthru
          _
        // Predicated region
        $region33: #{tpu_custom_call.1} parent=11 // pred_check
          %p460 = pneg %p192
        $region34: #{tpu_custom_call.1} parent=11 // pred_check_branch
          %462 = sbr.rel (%p460) target = $region36
        $region35: #{tpu_custom_call.1} parent=11 // pred_region
          _
        $region36: #{tpu_custom_call.1} parent=11 // pred_fallthru
          _
        // Predicated region
        $region37: #{tpu_custom_call.1} parent=11 // pred_check
          %p463 = pneg %p213
        $region38: #{tpu_custom_call.1} parent=11 // pred_check_branch
          %465 = sbr.rel (%p463) target = $region40
        $region39: #{tpu_custom_call.1} parent=11 // pred_region
          _
        $region40: #{tpu_custom_call.1} parent=11 // pred_fallthru
          _
        // Predicated region
        $region41: #{tpu_custom_call.1} parent=11 // pred_check
          %p466 = pneg %p234
        $region42: #{tpu_custom_call.1} parent=11 // pred_check_branch
          %468 = sbr.rel (%p466) target = $region44
        $region43: #{tpu_custom_call.1} parent=11 // pred_region
          _
        $region44: #{tpu_custom_call.1} parent=11 // pred_fallthru
          _
        // Predicated region
        $region45: #{tpu_custom_call.1} parent=11 // pred_check
          %p469 = pneg %p255
        $region46: #{tpu_custom_call.1} parent=11 // pred_check_branch
          %471 = sbr.rel (%p469) target = $region48
        $region47: #{tpu_custom_call.1} parent=11 // pred_region
          _
        $region48: #{tpu_custom_call.1} parent=11 // pred_fallthru
          _
        // Predicated region
        $region49: #{tpu_custom_call.1} parent=11 // pred_check
          %p472 = pneg %p276
        $region50: #{tpu_custom_call.1} parent=11 // pred_check_branch
          %474 = sbr.rel (%p472) target = $region52
        $region51: #{tpu_custom_call.1} parent=11 // pred_region
          _
        $region52: #{tpu_custom_call.1} parent=11 // pred_fallthru
          _
        // Predicated region
        $region53: #{tpu_custom_call.1} parent=11 // pred_check
          %p475 = pneg %p297
        $region54: #{tpu_custom_call.1} parent=11 // pred_check_branch
          %477 = sbr.rel (%p475) target = $region56
        $region55: #{tpu_custom_call.1} parent=11 // pred_region
          _
        $region56: #{tpu_custom_call.1} parent=11 // pred_fallthru
          _
        // Predicated region
        $region57: #{tpu_custom_call.1} parent=11 // pred_check
          %p478 = pneg %p318
        $region58: #{tpu_custom_call.1} parent=11 // pred_check_branch
          %480 = sbr.rel (%p478) target = $region60
        $region59: #{tpu_custom_call.1} parent=11 // pred_region
          _
        $region60: #{tpu_custom_call.1} parent=11 // pred_fallthru
          _
        // Predicated region
        $region61: #{tpu_custom_call.1} parent=11 // pred_check
          %p481 = pneg %p339
        $region62: #{tpu_custom_call.1} parent=11 // pred_check_branch
          %483 = sbr.rel (%p481) target = $region64
        $region63: #{tpu_custom_call.1} parent=11 // pred_region
          _
        $region64: #{tpu_custom_call.1} parent=11 // pred_fallthru
          _
        // Predicated region
        $region65: #{tpu_custom_call.1} parent=11 // pred_check
          %p484 = pneg %p360
        $region66: #{tpu_custom_call.1} parent=11 // pred_check_branch
          %486 = sbr.rel (%p484) target = $region68
        $region67: #{tpu_custom_call.1} parent=11 // pred_region
          _
        $region68: #{tpu_custom_call.1} parent=11 // pred_fallthru
          _
        // Predicated region
        $region69: #{tpu_custom_call.1} parent=11 // pred_check
          %p487 = pneg %p381
        $region70: #{tpu_custom_call.1} parent=11 // pred_check_branch
          %489 = sbr.rel (%p487) target = $region72
        $region71: #{tpu_custom_call.1} parent=11 // pred_region
          _
        $region72: #{tpu_custom_call.1} parent=11 // pred_fallthru
          _
        // Predicated region
        $region73: #{tpu_custom_call.1} parent=11 // pred_check
          %p490 = pneg %p402
        $region74: #{tpu_custom_call.1} parent=11 // pred_check_branch
          %492 = sbr.rel (%p490) target = $region76
        $region75: #{tpu_custom_call.1} parent=11 // pred_region
          _
        $region76: #{tpu_custom_call.1} parent=11 // pred_fallthru
          _
      $region12: #{tpu_custom_call.1} parent=5 // pred_fallthru
        _
      %p493 = scmp.lt.s32.totalorder %s26, 4
      // Predicated region
      $region77: #{tpu_custom_call.1} parent=5 // pred_check
        %p494 = pneg %p493
      $region78: #{tpu_custom_call.1} parent=5 // pred_check_branch
        %496 = sbr.rel (%p494) target = $region80
      $region79: #{tpu_custom_call.1} parent=5 // pred_region
        // Predicated region
        $region81: #{tpu_custom_call.1} parent=79 // pred_check
          %p497 = pneg %p60
        $region82: #{tpu_custom_call.1} parent=79 // pred_check_branch
          %499 = sbr.rel (%p497) target = $region84
        $region83: #{tpu_custom_call.1} parent=79 // pred_region
          %p500 = scmp.lt.s32.totalorder %s33, 1
          %s501 = scalar_select %p500, %s33, 1
          %p502 = scmp.lt.s32.totalorder %s34, 1
          %s503 = scalar_select %p502, %s34, 1
          %s504 = smul.addr %s501, 2
          %s505 = sadd.s32 %s503, %s504
          %s506 = smul.addr %s505, 4
          %s507 = scalar_lea.vmem %s0, %s506
        $region84: #{tpu_custom_call.1} parent=79 // pred_fallthru
          _
      $region80: #{tpu_custom_call.1} parent=5 // pred_fallthru
        _
      %p508 = scmp.le.s32.totalorder 1, %s26
      %p509 = scmp.lt.s32.totalorder %s26, 5
      %p510 = pnand %p508, %p509
      %p511 = pneg %p510
      // Predicated region
      $region85: #{tpu_custom_call.1} parent=5 // pred_check
        _
      $region86: #{tpu_custom_call.1} parent=5 // pred_check_branch
        %513 = sbr.rel (%p510) target = $region88
      $region87: #{tpu_custom_call.1} parent=5 // pred_region
        %s514 = ssub.s32 %s26, 1
        %p515 = scmp.lt.s32.totalorder %s35, 1
        %s516 = scalar_select %p515, %s35, 1
        %p517 = scmp.lt.s32.totalorder %s36, 1
        %s518 = scalar_select %p517, %s36, 1
        %s519 = smul.addr %s516, 2
        %s520 = sadd.s32 %s518, %s519
        %s521 = smul.addr %s520, 4
        %s522 = scalar_lea.vmem %s0, %s521
        %p523 = pneg %p66
        %p524 = pneg %p63
        %p525 = pneg %p87
        %p526 = pneg %p84
        %p527 = pneg %p108
        %p528 = pneg %p105
        %p529 = pneg %p129
        %p530 = pneg %p126
        %p531 = pneg %p150
        %p532 = pneg %p147
        %p533 = pneg %p171
        %p534 = pneg %p168
        %p535 = pneg %p192
        %p536 = pneg %p189
        %p537 = pneg %p213
        %p538 = pneg %p210
        %p539 = pneg %p234
        %p540 = pneg %p231
        %p541 = pneg %p255
        %p542 = pneg %p252
        %p543 = pneg %p276
        %p544 = pneg %p273
        %p545 = pneg %p297
        %p546 = pneg %p294
        %p547 = pneg %p318
        %p548 = pneg %p315
        %p549 = pneg %p339
        %p550 = pneg %p336
        %p551 = pneg %p360
        %p552 = pneg %p357
        %p553 = pneg %p381
        %p554 = pneg %p378
        %p555 = pneg %p402
        %p556 = pneg %p399
        %p557 = pneg %p430
        %p558 = pneg %p427
        %s559 = sand.u32 %s417, 1
        %s560 = scalar_lea.sflag [#allocation3], %s559
        %s561 = sand.u32 %s417, 1
        %s562 = smul.addr %s561, 8
        %s563 = scalar_lea.vmem [#allocation2], %s562
        %p564 = scmp.lt.s32.totalorder %s35, 1
        %s565 = scalar_select %p564, %s35, 1
        %p566 = scmp.lt.s32.totalorder %s36, 1
        %s567 = scalar_select %p566, %s36, 1
        %s568 = smul.addr %s565, 2
        %s569 = sadd.s32 %s567, %s568
        %s570 = smul.addr %s569, 4
        %s571 = scalar_lea.vmem %s0, %s570
        %v573 = vld [vmem:[%s571] sm:$0xf]
        %v574 = vld [vmem:[%s1] sm:$0xf]
        %v575 = vld [vmem:[%s1 + $0x4] sm:$0xf]
        %v576 = vld [vmem:[%s1 + $0x8] sm:$0xf]
        %v577 = vld [vmem:[%s1 + $0xc] sm:$0xf]
        %v578 = vld [vmem:[%s1 + $0x10] sm:$0xf]
        %v579 = vld [vmem:[%s1 + $0x14] sm:$0xf]
        %v580 = vld [vmem:[%s1 + $0x18] sm:$0xf]
        %v581 = vld [vmem:[%s1 + $0x1c] sm:$0xf]
        %v582 = vld [vmem:[%s1 + $0x20] sm:$0xf]
        %v583 = vld [vmem:[%s1 + $0x24] sm:$0xf]
        %v584 = vld [vmem:[%s1 + $0x28] sm:$0xf]
        %v585 = vld [vmem:[%s1 + $0x2c] sm:$0xf]
        %v586 = vld [vmem:[%s1 + $0x30] sm:$0xf]
        %v587 = vld [vmem:[%s1 + $0x34] sm:$0xf]
        %v588 = vld [vmem:[%s1 + $0x38] sm:$0xf]
        %v589 = vld [vmem:[%s1 + $0x3c] sm:$0xf]
        %v590 = vld [vmem:[%s1 + $0x40] sm:$0xf]
        %v591 = vld [vmem:[%s1 + $0x44] sm:$0xf]
        %v592 = vld [vmem:[%s1 + $0x48] sm:$0xf]
        %v593 = vld [vmem:[%s1 + $0x4c] sm:$0xf]
        %v594 = vld [vmem:[%s1 + $0x50] sm:$0xf]
        %v595 = vld [vmem:[%s1 + $0x54] sm:$0xf]
        %v596 = vld [vmem:[%s1 + $0x58] sm:$0xf]
        %v597 = vld [vmem:[%s1 + $0x5c] sm:$0xf]
        %v598 = vld [vmem:[%s1 + $0x60] sm:$0xf]
        %v599 = vld [vmem:[%s1 + $0x64] sm:$0xf]
        %v600 = vld [vmem:[%s1 + $0x68] sm:$0xf]
        %v601 = vld [vmem:[%s1 + $0x6c] sm:$0xf]
        %v602 = vld [vmem:[%s1 + $0x70] sm:$0xf]
        %v603 = vld [vmem:[%s1 + $0x74] sm:$0xf]
        %v604 = vld [vmem:[%s1 + $0x78] sm:$0xf]
        %v605 = vld [vmem:[%s1 + $0x7c] sm:$0xf]
        %v606 = vld [vmem:[%s2] sm:$0x1]
        %v607 = vld [vmem:[%s2 + $0x1] sm:$0x1]
        %v610 = vlaneseq
        %v611 = vshrl.u32 %v610, 7
        %v612 = vsub.s32 0, %v611
        %v613 = vrot.slane %v606, %v612
        %v614 = vlaneseq
        %v615 = vshrl.u32 %v614, 7
        %v616 = vsub.s32 0, %v615
        %v617 = vrot.slane %v607, %v616
        %v636 = vunpack.c.l.b16 %v574
        %v637 = vunpack.c.l.b16 %v575
        %v638 = vunpack.c.l.b16 %v576
        %v639 = vunpack.c.l.b16 %v577
        %v640 = vunpack.c.l.b16 %v578
        %v641 = vunpack.c.l.b16 %v579
        %v642 = vunpack.c.l.b16 %v580
        %v643 = vunpack.c.l.b16 %v581
        %v644 = vunpack.c.l.b16 %v582
        %v645 = vunpack.c.l.b16 %v583
        %v646 = vunpack.c.l.b16 %v584
        %v647 = vunpack.c.l.b16 %v585
        %v648 = vunpack.c.l.b16 %v586
        %v649 = vunpack.c.l.b16 %v587
        %v650 = vunpack.c.l.b16 %v588
        %v651 = vunpack.c.l.b16 %v589
        %v652 = vpack.c.b16 %v637, %v636
        %v653 = vpack.c.b16 %v639, %v638
        %v654 = vpack.c.b16 %v641, %v640
        %v655 = vpack.c.b16 %v643, %v642
        %v656 = vpack.c.b16 %v645, %v644
        %v657 = vpack.c.b16 %v647, %v646
        %v658 = vpack.c.b16 %v649, %v648
        %v659 = vpack.c.b16 %v651, %v650
        %668 = vmatprep.subr.bf16.mxu0 0
        %669 = vmatpush1.bf16.msra.mxu0 %v652
        %670 = vmatprep.subr.bf16.mxu0 0
        %671 = vmatpush1.bf16.msra.mxu0 %v653
        %672 = vmatprep.subr.bf16.mxu0 0
        %673 = vmatpush1.bf16.msra.mxu0 %v654
        %674 = vmatprep.subr.bf16.mxu0 0
        %675 = vmatpush1.bf16.msra.mxu0 %v655
        %676 = vmatprep.subr.bf16.mxu0 0
        %677 = vmatpush1.bf16.msra.mxu0 %v656
        %678 = vmatprep.subr.bf16.mxu0 0
        %679 = vmatpush1.bf16.msra.mxu0 %v657
        %680 = vmatprep.subr.bf16.mxu0 0
        %681 = vmatpush1.bf16.msra.mxu0 %v658
        %682 = vmatprep.subr.bf16.mxu0 0
        %683 = vmatpush1.bf16.msra.mxu0 %v659
        %684 = vmatprep.subr.bf16.mxu0 0
        %685 = vmatpush1.bf16.msra.mxu0 0
        %686 = vmatprep.subr.bf16.mxu0 0
        %687 = vmatpush1.bf16.msra.mxu0 0
        %688 = vmatprep.subr.bf16.mxu0 0
        %689 = vmatpush1.bf16.msra.mxu0 0
        %690 = vmatprep.subr.bf16.mxu0 0
        %691 = vmatpush1.bf16.msra.mxu0 0
        %692 = vmatprep.subr.bf16.mxu0 0
        %693 = vmatpush1.bf16.msra.mxu0 0
        %694 = vmatprep.subr.bf16.mxu0 0
        %695 = vmatpush1.bf16.msra.mxu0 0
        %696 = vmatprep.subr.bf16.mxu0 0
        %697 = vmatpush1.bf16.msra.mxu0 0
        %698 = vmatprep.subr.bf16.mxu0 0
        %699 = vmatpush1.bf16.msra.mxu0 0
        %700 = vmatprep.mubr.bf16.mxu0 0
        %701 = vmatmul.mubr.bf16.gmra.mrb[0].mxu0 %v573
        %v702 = vpop.f32.mrb[0].mxu0
        %v703 = vadd.f32 %v613, %v702
        %v704 = vpop.f32.mrb[0].mxu0
        %v705 = vpop.f32.mrb[0].mxu0
        %v706 = vpop.f32.mrb[0].mxu0
        %707 = vdwg.mxu0
        %v724 = vunpack.c.l.b16 %v590
        %v725 = vunpack.c.l.b16 %v591
        %v726 = vunpack.c.l.b16 %v592
        %v727 = vunpack.c.l.b16 %v593
        %v728 = vunpack.c.l.b16 %v594
        %v729 = vunpack.c.l.b16 %v595
        %v730 = vunpack.c.l.b16 %v596
        %v731 = vunpack.c.l.b16 %v597
        %v732 = vunpack.c.l.b16 %v598
        %v733 = vunpack.c.l.b16 %v599
        %v734 = vunpack.c.l.b16 %v600
        %v735 = vunpack.c.l.b16 %v601
        %v736 = vunpack.c.l.b16 %v602
        %v737 = vunpack.c.l.b16 %v603
        %v738 = vunpack.c.l.b16 %v604
        %v739 = vunpack.c.l.b16 %v605
        %v740 = vpack.c.b16 %v725, %v724
        %v741 = vpack.c.b16 %v727, %v726
        %v742 = vpack.c.b16 %v729, %v728
        %v743 = vpack.c.b16 %v731, %v730
        %v744 = vpack.c.b16 %v733, %v732
        %v745 = vpack.c.b16 %v735, %v734
        %v746 = vpack.c.b16 %v737, %v736
        %v747 = vpack.c.b16 %v739, %v738
        %756 = vmatprep.subr.bf16.mxu0 0
        %757 = vmatpush1.bf16.msra.mxu0 %v740
        %758 = vmatprep.subr.bf16.mxu0 0
        %759 = vmatpush1.bf16.msra.mxu0 %v741
        %760 = vmatprep.subr.bf16.mxu0 0
        %761 = vmatpush1.bf16.msra.mxu0 %v742
        %762 = vmatprep.subr.bf16.mxu0 0
        %763 = vmatpush1.bf16.msra.mxu0 %v743
        %764 = vmatprep.subr.bf16.mxu0 0
        %765 = vmatpush1.bf16.msra.mxu0 %v744
        %766 = vmatprep.subr.bf16.mxu0 0
        %767 = vmatpush1.bf16.msra.mxu0 %v745
        %768 = vmatprep.subr.bf16.mxu0 0
        %769 = vmatpush1.bf16.msra.mxu0 %v746
        %770 = vmatprep.subr.bf16.mxu0 0
        %771 = vmatpush1.bf16.msra.mxu0 %v747
        %772 = vmatprep.subr.bf16.mxu0 0
        %773 = vmatpush1.bf16.msra.mxu0 0
        %774 = vmatprep.subr.bf16.mxu0 0
        %775 = vmatpush1.bf16.msra.mxu0 0
        %776 = vmatprep.subr.bf16.mxu0 0
        %777 = vmatpush1.bf16.msra.mxu0 0
        %778 = vmatprep.subr.bf16.mxu0 0
        %779 = vmatpush1.bf16.msra.mxu0 0
        %780 = vmatprep.subr.bf16.mxu0 0
        %781 = vmatpush1.bf16.msra.mxu0 0
        %782 = vmatprep.subr.bf16.mxu0 0
        %783 = vmatpush1.bf16.msra.mxu0 0
        %784 = vmatprep.subr.bf16.mxu0 0
        %785 = vmatpush1.bf16.msra.mxu0 0
        %786 = vmatprep.subr.bf16.mxu0 0
        %787 = vmatpush1.bf16.msra.mxu0 0
        %788 = vmatprep.mubr.bf16.mxu0 0
        %789 = vmatmul.mubr.bf16.gmra.mrb[0].mxu0 %v573
        %v790 = vpop.f32.mrb[0].mxu0
        %v791 = vadd.f32 %v617, %v790
        %v792 = vpop.f32.mrb[0].mxu0
        %v793 = vpop.f32.mrb[0].mxu0
        %v794 = vpop.f32.mrb[0].mxu0
        %795 = vdwg.mxu0
        %v796 = vld [vmem:[%s3] sm:$0xf]
        %v797 = vld [vmem:[%s3 + $0x4] sm:$0xf]
        %v798 = vld [vmem:[%s3 + $0x8] sm:$0xf]
        %v799 = vld [vmem:[%s3 + $0xc] sm:$0xf]
        %v800 = vld [vmem:[%s3 + $0x10] sm:$0xf]
        %v801 = vld [vmem:[%s3 + $0x14] sm:$0xf]
        %v802 = vld [vmem:[%s3 + $0x18] sm:$0xf]
        %v803 = vld [vmem:[%s3 + $0x1c] sm:$0xf]
        %v804 = vld [vmem:[%s3 + $0x20] sm:$0xf]
        %v805 = vld [vmem:[%s3 + $0x24] sm:$0xf]
        %v806 = vld [vmem:[%s3 + $0x28] sm:$0xf]
        %v807 = vld [vmem:[%s3 + $0x2c] sm:$0xf]
        %v808 = vld [vmem:[%s3 + $0x30] sm:$0xf]
        %v809 = vld [vmem:[%s3 + $0x34] sm:$0xf]
        %v810 = vld [vmem:[%s3 + $0x38] sm:$0xf]
        %v811 = vld [vmem:[%s3 + $0x3c] sm:$0xf]
        %v812 = vld [vmem:[%s3 + $0x40] sm:$0xf]
        %v813 = vld [vmem:[%s3 + $0x44] sm:$0xf]
        %v814 = vld [vmem:[%s3 + $0x48] sm:$0xf]
        %v815 = vld [vmem:[%s3 + $0x4c] sm:$0xf]
        %v816 = vld [vmem:[%s3 + $0x50] sm:$0xf]
        %v817 = vld [vmem:[%s3 + $0x54] sm:$0xf]
        %v818 = vld [vmem:[%s3 + $0x58] sm:$0xf]
        %v819 = vld [vmem:[%s3 + $0x5c] sm:$0xf]
        %v820 = vld [vmem:[%s3 + $0x60] sm:$0xf]
        %v821 = vld [vmem:[%s3 + $0x64] sm:$0xf]
        %v822 = vld [vmem:[%s3 + $0x68] sm:$0xf]
        %v823 = vld [vmem:[%s3 + $0x6c] sm:$0xf]
        %v824 = vld [vmem:[%s3 + $0x70] sm:$0xf]
        %v825 = vld [vmem:[%s3 + $0x74] sm:$0xf]
        %v826 = vld [vmem:[%s3 + $0x78] sm:$0xf]
        %v827 = vld [vmem:[%s3 + $0x7c] sm:$0xf]
        %v828 = vld [vmem:[%s4] sm:$0x1]
        %v829 = vld [vmem:[%s4 + $0x1] sm:$0x1]
        %v832 = vlaneseq
        %v833 = vshrl.u32 %v832, 7
        %v834 = vsub.s32 0, %v833
        %v835 = vrot.slane %v828, %v834
        %v836 = vlaneseq
        %v837 = vshrl.u32 %v836, 7
        %v838 = vsub.s32 0, %v837
        %v839 = vrot.slane %v829, %v838
        %v858 = vunpack.c.l.b16 %v796
        %v859 = vunpack.c.l.b16 %v797
        %v860 = vunpack.c.l.b16 %v798
        %v861 = vunpack.c.l.b16 %v799
        %v862 = vunpack.c.l.b16 %v800
        %v863 = vunpack.c.l.b16 %v801
        %v864 = vunpack.c.l.b16 %v802
        %v865 = vunpack.c.l.b16 %v803
        %v866 = vunpack.c.l.b16 %v804
        %v867 = vunpack.c.l.b16 %v805
        %v868 = vunpack.c.l.b16 %v806
        %v869 = vunpack.c.l.b16 %v807
        %v870 = vunpack.c.l.b16 %v808
        %v871 = vunpack.c.l.b16 %v809
        %v872 = vunpack.c.l.b16 %v810
        %v873 = vunpack.c.l.b16 %v811
        %v874 = vpack.c.b16 %v859, %v858
        %v875 = vpack.c.b16 %v861, %v860
        %v876 = vpack.c.b16 %v863, %v862
        %v877 = vpack.c.b16 %v865, %v864
        %v878 = vpack.c.b16 %v867, %v866
        %v879 = vpack.c.b16 %v869, %v868
        %v880 = vpack.c.b16 %v871, %v870
        %v881 = vpack.c.b16 %v873, %v872
        %890 = vmatprep.subr.bf16.mxu0 0
        %891 = vmatpush1.bf16.msra.mxu0 %v874
        %892 = vmatprep.subr.bf16.mxu0 0
        %893 = vmatpush1.bf16.msra.mxu0 %v875
        %894 = vmatprep.subr.bf16.mxu0 0
        %895 = vmatpush1.bf16.msra.mxu0 %v876
        %896 = vmatprep.subr.bf16.mxu0 0
        %897 = vmatpush1.bf16.msra.mxu0 %v877
        %898 = vmatprep.subr.bf16.mxu0 0
        %899 = vmatpush1.bf16.msra.mxu0 %v878
        %900 = vmatprep.subr.bf16.mxu0 0
        %901 = vmatpush1.bf16.msra.mxu0 %v879
        %902 = vmatprep.subr.bf16.mxu0 0
        %903 = vmatpush1.bf16.msra.mxu0 %v880
        %904 = vmatprep.subr.bf16.mxu0 0
        %905 = vmatpush1.bf16.msra.mxu0 %v881
        %906 = vmatprep.subr.bf16.mxu0 0
        %907 = vmatpush1.bf16.msra.mxu0 0
        %908 = vmatprep.subr.bf16.mxu0 0
        %909 = vmatpush1.bf16.msra.mxu0 0
        %910 = vmatprep.subr.bf16.mxu0 0
        %911 = vmatpush1.bf16.msra.mxu0 0
        %912 = vmatprep.subr.bf16.mxu0 0
        %913 = vmatpush1.bf16.msra.mxu0 0
        %914 = vmatprep.subr.bf16.mxu0 0
        %915 = vmatpush1.bf16.msra.mxu0 0
        %916 = vmatprep.subr.bf16.mxu0 0
        %917 = vmatpush1.bf16.msra.mxu0 0
        %918 = vmatprep.subr.bf16.mxu0 0
        %919 = vmatpush1.bf16.msra.mxu0 0
        %920 = vmatprep.subr.bf16.mxu0 0
        %921 = vmatpush1.bf16.msra.mxu0 0
        %922 = vmatprep.mubr.bf16.mxu0 0
        %923 = vmatmul.mubr.bf16.gmra.mrb[0].mxu0 %v573
        %v924 = vpop.f32.mrb[0].mxu0
        %v925 = vadd.f32 %v835, %v924
        %v926 = vpop.f32.mrb[0].mxu0
        %v927 = vpop.f32.mrb[0].mxu0
        %v928 = vpop.f32.mrb[0].mxu0
        %929 = vdwg.mxu0
        %v946 = vunpack.c.l.b16 %v812
        %v947 = vunpack.c.l.b16 %v813
        %v948 = vunpack.c.l.b16 %v814
        %v949 = vunpack.c.l.b16 %v815
        %v950 = vunpack.c.l.b16 %v816
        %v951 = vunpack.c.l.b16 %v817
        %v952 = vunpack.c.l.b16 %v818
        %v953 = vunpack.c.l.b16 %v819
        %v954 = vunpack.c.l.b16 %v820
        %v955 = vunpack.c.l.b16 %v821
        %v956 = vunpack.c.l.b16 %v822
        %v957 = vunpack.c.l.b16 %v823
        %v958 = vunpack.c.l.b16 %v824
        %v959 = vunpack.c.l.b16 %v825
        %v960 = vunpack.c.l.b16 %v826
        %v961 = vunpack.c.l.b16 %v827
        %v962 = vpack.c.b16 %v947, %v946
        %v963 = vpack.c.b16 %v949, %v948
        %v964 = vpack.c.b16 %v951, %v950
        %v965 = vpack.c.b16 %v953, %v952
        %v966 = vpack.c.b16 %v955, %v954
        %v967 = vpack.c.b16 %v957, %v956
        %v968 = vpack.c.b16 %v959, %v958
        %v969 = vpack.c.b16 %v961, %v960
        %978 = vmatprep.subr.bf16.mxu0 0
        %979 = vmatpush1.bf16.msra.mxu0 %v962
        %980 = vmatprep.subr.bf16.mxu0 0
        %981 = vmatpush1.bf16.msra.mxu0 %v963
        %982 = vmatprep.subr.bf16.mxu0 0
        %983 = vmatpush1.bf16.msra.mxu0 %v964
        %984 = vmatprep.subr.bf16.mxu0 0
        %985 = vmatpush1.bf16.msra.mxu0 %v965
        %986 = vmatprep.subr.bf16.mxu0 0
        %987 = vmatpush1.bf16.msra.mxu0 %v966
        %988 = vmatprep.subr.bf16.mxu0 0
        %989 = vmatpush1.bf16.msra.mxu0 %v967
        %990 = vmatprep.subr.bf16.mxu0 0
        %991 = vmatpush1.bf16.msra.mxu0 %v968
        %992 = vmatprep.subr.bf16.mxu0 0
        %993 = vmatpush1.bf16.msra.mxu0 %v969
        %994 = vmatprep.subr.bf16.mxu0 0
        %995 = vmatpush1.bf16.msra.mxu0 0
        %996 = vmatprep.subr.bf16.mxu0 0
        %997 = vmatpush1.bf16.msra.mxu0 0
        %998 = vmatprep.subr.bf16.mxu0 0
        %999 = vmatpush1.bf16.msra.mxu0 0
        %1000 = vmatprep.subr.bf16.mxu0 0
        %1001 = vmatpush1.bf16.msra.mxu0 0
        %1002 = vmatprep.subr.bf16.mxu0 0
        %1003 = vmatpush1.bf16.msra.mxu0 0
        %1004 = vmatprep.subr.bf16.mxu0 0
        %1005 = vmatpush1.bf16.msra.mxu0 0
        %1006 = vmatprep.subr.bf16.mxu0 0
        %1007 = vmatpush1.bf16.msra.mxu0 0
        %1008 = vmatprep.subr.bf16.mxu0 0
        %1009 = vmatpush1.bf16.msra.mxu0 0
        %1010 = vmatprep.mubr.bf16.mxu0 0
        %1011 = vmatmul.mubr.bf16.gmra.mrb[0].mxu0 %v573
        %v1012 = vpop.f32.mrb[0].mxu0
        %v1013 = vadd.f32 %v839, %v1012
        %v1014 = vpop.f32.mrb[0].mxu0
        %v1015 = vpop.f32.mrb[0].mxu0
        %v1016 = vpop.f32.mrb[0].mxu0
        %1017 = vdwg.mxu0
        %v1018 = vld [vmem:[%s5] sm:$0xf]
        %v1019 = vld [vmem:[%s5 + $0x4] sm:$0xf]
        %v1020 = vld [vmem:[%s5 + $0x8] sm:$0xf]
        %v1021 = vld [vmem:[%s5 + $0xc] sm:$0xf]
        %v1022 = vld [vmem:[%s5 + $0x10] sm:$0xf]
        %v1023 = vld [vmem:[%s5 + $0x14] sm:$0xf]
        %v1024 = vld [vmem:[%s5 + $0x18] sm:$0xf]
        %v1025 = vld [vmem:[%s5 + $0x1c] sm:$0xf]
        %v1026 = vld [vmem:[%s5 + $0x20] sm:$0xf]
        %v1027 = vld [vmem:[%s5 + $0x24] sm:$0xf]
        %v1028 = vld [vmem:[%s5 + $0x28] sm:$0xf]
        %v1029 = vld [vmem:[%s5 + $0x2c] sm:$0xf]
        %v1030 = vld [vmem:[%s5 + $0x30] sm:$0xf]
        %v1031 = vld [vmem:[%s5 + $0x34] sm:$0xf]
        %v1032 = vld [vmem:[%s5 + $0x38] sm:$0xf]
        %v1033 = vld [vmem:[%s5 + $0x3c] sm:$0xf]
        %v1034 = vld [vmem:[%s5 + $0x40] sm:$0xf]
        %v1035 = vld [vmem:[%s5 + $0x44] sm:$0xf]
        %v1036 = vld [vmem:[%s5 + $0x48] sm:$0xf]
        %v1037 = vld [vmem:[%s5 + $0x4c] sm:$0xf]
        %v1038 = vld [vmem:[%s5 + $0x50] sm:$0xf]
        %v1039 = vld [vmem:[%s5 + $0x54] sm:$0xf]
        %v1040 = vld [vmem:[%s5 + $0x58] sm:$0xf]
        %v1041 = vld [vmem:[%s5 + $0x5c] sm:$0xf]
        %v1042 = vld [vmem:[%s5 + $0x60] sm:$0xf]
        %v1043 = vld [vmem:[%s5 + $0x64] sm:$0xf]
        %v1044 = vld [vmem:[%s5 + $0x68] sm:$0xf]
        %v1045 = vld [vmem:[%s5 + $0x6c] sm:$0xf]
        %v1046 = vld [vmem:[%s5 + $0x70] sm:$0xf]
        %v1047 = vld [vmem:[%s5 + $0x74] sm:$0xf]
        %v1048 = vld [vmem:[%s5 + $0x78] sm:$0xf]
        %v1049 = vld [vmem:[%s5 + $0x7c] sm:$0xf]
        %v1050 = vld [vmem:[%s6] sm:$0x1]
        %v1051 = vld [vmem:[%s6 + $0x1] sm:$0x1]
        %v1054 = vlaneseq
        %v1055 = vshrl.u32 %v1054, 7
        %v1056 = vsub.s32 0, %v1055
        %v1057 = vrot.slane %v1050, %v1056
        %v1058 = vlaneseq
        %v1059 = vshrl.u32 %v1058, 7
        %v1060 = vsub.s32 0, %v1059
        %v1061 = vrot.slane %v1051, %v1060
        %v1080 = vunpack.c.l.b16 %v1018
        %v1081 = vunpack.c.l.b16 %v1019
        %v1082 = vunpack.c.l.b16 %v1020
        %v1083 = vunpack.c.l.b16 %v1021
        %v1084 = vunpack.c.l.b16 %v1022
        %v1085 = vunpack.c.l.b16 %v1023
        %v1086 = vunpack.c.l.b16 %v1024
        %v1087 = vunpack.c.l.b16 %v1025
        %v1088 = vunpack.c.l.b16 %v1026
        %v1089 = vunpack.c.l.b16 %v1027
        %v1090 = vunpack.c.l.b16 %v1028
        %v1091 = vunpack.c.l.b16 %v1029
        %v1092 = vunpack.c.l.b16 %v1030
        %v1093 = vunpack.c.l.b16 %v1031
        %v1094 = vunpack.c.l.b16 %v1032
        %v1095 = vunpack.c.l.b16 %v1033
        %v1096 = vpack.c.b16 %v1081, %v1080
        %v1097 = vpack.c.b16 %v1083, %v1082
        %v1098 = vpack.c.b16 %v1085, %v1084
        %v1099 = vpack.c.b16 %v1087, %v1086
        %v1100 = vpack.c.b16 %v1089, %v1088
        %v1101 = vpack.c.b16 %v1091, %v1090
        %v1102 = vpack.c.b16 %v1093, %v1092
        %v1103 = vpack.c.b16 %v1095, %v1094
        %1112 = vmatprep.subr.bf16.mxu0 0
        %1113 = vmatpush1.bf16.msra.mxu0 %v1096
        %1114 = vmatprep.subr.bf16.mxu0 0
        %1115 = vmatpush1.bf16.msra.mxu0 %v1097
        %1116 = vmatprep.subr.bf16.mxu0 0
        %1117 = vmatpush1.bf16.msra.mxu0 %v1098
        %1118 = vmatprep.subr.bf16.mxu0 0
        %1119 = vmatpush1.bf16.msra.mxu0 %v1099
        %1120 = vmatprep.subr.bf16.mxu0 0
        %1121 = vmatpush1.bf16.msra.mxu0 %v1100
        %1122 = vmatprep.subr.bf16.mxu0 0
        %1123 = vmatpush1.bf16.msra.mxu0 %v1101
        %1124 = vmatprep.subr.bf16.mxu0 0
        %1125 = vmatpush1.bf16.msra.mxu0 %v1102
        %1126 = vmatprep.subr.bf16.mxu0 0
        %1127 = vmatpush1.bf16.msra.mxu0 %v1103
        %1128 = vmatprep.subr.bf16.mxu0 0
        %1129 = vmatpush1.bf16.msra.mxu0 0
        %1130 = vmatprep.subr.bf16.mxu0 0
        %1131 = vmatpush1.bf16.msra.mxu0 0
        %1132 = vmatprep.subr.bf16.mxu0 0
        %1133 = vmatpush1.bf16.msra.mxu0 0
        %1134 = vmatprep.subr.bf16.mxu0 0
        %1135 = vmatpush1.bf16.msra.mxu0 0
        %1136 = vmatprep.subr.bf16.mxu0 0
        %1137 = vmatpush1.bf16.msra.mxu0 0
        %1138 = vmatprep.subr.bf16.mxu0 0
        %1139 = vmatpush1.bf16.msra.mxu0 0
        %1140 = vmatprep.subr.bf16.mxu0 0
        %1141 = vmatpush1.bf16.msra.mxu0 0
        %1142 = vmatprep.subr.bf16.mxu0 0
        %1143 = vmatpush1.bf16.msra.mxu0 0
        %1144 = vmatprep.mubr.bf16.mxu0 0
        %1145 = vmatmul.mubr.bf16.gmra.mrb[0].mxu0 %v573
        %v1146 = vpop.f32.mrb[0].mxu0
        %v1147 = vadd.f32 %v1057, %v1146
        %v1148 = vpop.f32.mrb[0].mxu0
        %v1149 = vpop.f32.mrb[0].mxu0
        %v1150 = vpop.f32.mrb[0].mxu0
        %1151 = vdwg.mxu0
        %v1168 = vunpack.c.l.b16 %v1034
        %v1169 = vunpack.c.l.b16 %v1035
        %v1170 = vunpack.c.l.b16 %v1036
        %v1171 = vunpack.c.l.b16 %v1037
        %v1172 = vunpack.c.l.b16 %v1038
        %v1173 = vunpack.c.l.b16 %v1039
        %v1174 = vunpack.c.l.b16 %v1040
        %v1175 = vunpack.c.l.b16 %v1041
        %v1176 = vunpack.c.l.b16 %v1042
        %v1177 = vunpack.c.l.b16 %v1043
        %v1178 = vunpack.c.l.b16 %v1044
        %v1179 = vunpack.c.l.b16 %v1045
        %v1180 = vunpack.c.l.b16 %v1046
        %v1181 = vunpack.c.l.b16 %v1047
        %v1182 = vunpack.c.l.b16 %v1048
        %v1183 = vunpack.c.l.b16 %v1049
        %v1184 = vpack.c.b16 %v1169, %v1168
        %v1185 = vpack.c.b16 %v1171, %v1170
        %v1186 = vpack.c.b16 %v1173, %v1172
        %v1187 = vpack.c.b16 %v1175, %v1174
        %v1188 = vpack.c.b16 %v1177, %v1176
        %v1189 = vpack.c.b16 %v1179, %v1178
        %v1190 = vpack.c.b16 %v1181, %v1180
        %v1191 = vpack.c.b16 %v1183, %v1182
        %1200 = vmatprep.subr.bf16.mxu0 0
        %1201 = vmatpush1.bf16.msra.mxu0 %v1184
        %1202 = vmatprep.subr.bf16.mxu0 0
        %1203 = vmatpush1.bf16.msra.mxu0 %v1185
        %1204 = vmatprep.subr.bf16.mxu0 0
        %1205 = vmatpush1.bf16.msra.mxu0 %v1186
        %1206 = vmatprep.subr.bf16.mxu0 0
        %1207 = vmatpush1.bf16.msra.mxu0 %v1187
        %1208 = vmatprep.subr.bf16.mxu0 0
        %1209 = vmatpush1.bf16.msra.mxu0 %v1188
        %1210 = vmatprep.subr.bf16.mxu0 0
        %1211 = vmatpush1.bf16.msra.mxu0 %v1189
        %1212 = vmatprep.subr.bf16.mxu0 0
        %1213 = vmatpush1.bf16.msra.mxu0 %v1190
        %1214 = vmatprep.subr.bf16.mxu0 0
        %1215 = vmatpush1.bf16.msra.mxu0 %v1191
        %1216 = vmatprep.subr.bf16.mxu0 0
        %1217 = vmatpush1.bf16.msra.mxu0 0
        %1218 = vmatprep.subr.bf16.mxu0 0
        %1219 = vmatpush1.bf16.msra.mxu0 0
        %1220 = vmatprep.subr.bf16.mxu0 0
        %1221 = vmatpush1.bf16.msra.mxu0 0
        %1222 = vmatprep.subr.bf16.mxu0 0
        %1223 = vmatpush1.bf16.msra.mxu0 0
        %1224 = vmatprep.subr.bf16.mxu0 0
        %1225 = vmatpush1.bf16.msra.mxu0 0
        %1226 = vmatprep.subr.bf16.mxu0 0
        %1227 = vmatpush1.bf16.msra.mxu0 0
        %1228 = vmatprep.subr.bf16.mxu0 0
        %1229 = vmatpush1.bf16.msra.mxu0 0
        %1230 = vmatprep.subr.bf16.mxu0 0
        %1231 = vmatpush1.bf16.msra.mxu0 0
        %1232 = vmatprep.mubr.bf16.mxu0 0
        %1233 = vmatmul.mubr.bf16.gmra.mrb[0].mxu0 %v573
        %v1234 = vpop.f32.mrb[0].mxu0
        %v1235 = vadd.f32 %v1061, %v1234
        %v1236 = vpop.f32.mrb[0].mxu0
        %v1237 = vpop.f32.mrb[0].mxu0
        %v1238 = vpop.f32.mrb[0].mxu0
        %1239 = vdwg.mxu0
        %v1240 = vpack.c.bf16 %v703, %v703
        %v1241 = vpack.c.bf16 %v791, %v791
        %v1242 = vpack.c.bf16 %v925, %v925
        %v1243 = vpack.c.bf16 %v1013, %v1013
        %vm1244 = vcmask 64512
        %v1246 = vsel %vm1244, %v1240, 0
        %v1249 = vsel %vm1244, %v1242, 0
        %1251 = vmatprep.subr.bf16.mxu0 0
        %1252 = vmatpush1.bf16.xpose.msra.mxu0 %v1249
        %1253 = vmatprep.subr.bf16.mxu0 0
        %1254 = vmatpush1.bf16.xpose.msra.mxu0 0
        %1255 = vmatprep.subr.bf16.mxu0 0
        %1256 = vmatpush1.bf16.xpose.msra.mxu0 0
        %1257 = vmatprep.subr.bf16.mxu0 0
        %1258 = vmatpush1.bf16.xpose.msra.mxu0 0
        %1259 = vmatprep.subr.bf16.mxu0 0
        %1260 = vmatpush1.bf16.xpose.msra.mxu0 0
        %1261 = vmatprep.subr.bf16.mxu0 0
        %1262 = vmatpush1.bf16.xpose.msra.mxu0 0
        %1263 = vmatprep.subr.bf16.mxu0 0
        %1264 = vmatpush1.bf16.xpose.msra.mxu0 0
        %1265 = vmatprep.subr.bf16.mxu0 0
        %1266 = vmatpush1.bf16.xpose.msra.mxu0 0
        %1267 = vmatprep.subr.bf16.mxu0 0
        %1268 = vmatpush1.bf16.xpose.msra.mxu0 0
        %1269 = vmatprep.subr.bf16.mxu0 0
        %1270 = vmatpush1.bf16.xpose.msra.mxu0 0
        %1271 = vmatprep.subr.bf16.mxu0 0
        %1272 = vmatpush1.bf16.xpose.msra.mxu0 0
        %1273 = vmatprep.subr.bf16.mxu0 0
        %1274 = vmatpush1.bf16.xpose.msra.mxu0 0
        %1275 = vmatprep.subr.bf16.mxu0 0
        %1276 = vmatpush1.bf16.xpose.msra.mxu0 0
        %1277 = vmatprep.subr.bf16.mxu0 0
        %1278 = vmatpush1.bf16.xpose.msra.mxu0 0
        %1279 = vmatprep.subr.bf16.mxu0 0
        %1280 = vmatpush1.bf16.xpose.msra.mxu0 0
        %1281 = vmatprep.subr.bf16.mxu0 0
        %1282 = vmatpush1.bf16.xpose.msra.mxu0 0
        %1283 = vmatprep.mubr.bf16.mxu0 0
        %1284 = vmatmul.mubr.bf16.gmra.mrb[0].mxu0 %v1246
        %v1285 = vpop.f32.mrb[0].mxu0
        %v1286 = vadd.f32 0.0, %v1285
        %v1287 = vpop.f32.mrb[0].mxu0
        %v1288 = vpop.f32.mrb[0].mxu0
        %v1289 = vpop.f32.mrb[0].mxu0
        %1290 = vdwg.mxu0
        %v1292 = vsel %vm1244, %v1241, 0
        %v1295 = vsel %vm1244, %v1243, 0
        %1297 = vmatprep.subr.bf16.mxu0 0
        %1298 = vmatpush1.bf16.xpose.msra.mxu0 %v1295
        %1299 = vmatprep.subr.bf16.mxu0 0
        %1300 = vmatpush1.bf16.xpose.msra.mxu0 0
        %1301 = vmatprep.subr.bf16.mxu0 0
        %1302 = vmatpush1.bf16.xpose.msra.mxu0 0
        %1303 = vmatprep.subr.bf16.mxu0 0
        %1304 = vmatpush1.bf16.xpose.msra.mxu0 0
        %1305 = vmatprep.subr.bf16.mxu0 0
        %1306 = vmatpush1.bf16.xpose.msra.mxu0 0
        %1307 = vmatprep.subr.bf16.mxu0 0
        %1308 = vmatpush1.bf16.xpose.msra.mxu0 0
        %1309 = vmatprep.subr.bf16.mxu0 0
        %1310 = vmatpush1.bf16.xpose.msra.mxu0 0
        %1311 = vmatprep.subr.bf16.mxu0 0
        %1312 = vmatpush1.bf16.xpose.msra.mxu0 0
        %1313 = vmatprep.subr.bf16.mxu0 0
        %1314 = vmatpush1.bf16.xpose.msra.mxu0 0
        %1315 = vmatprep.subr.bf16.mxu0 0
        %1316 = vmatpush1.bf16.xpose.msra.mxu0 0
        %1317 = vmatprep.subr.bf16.mxu0 0
        %1318 = vmatpush1.bf16.xpose.msra.mxu0 0
        %1319 = vmatprep.subr.bf16.mxu0 0
        %1320 = vmatpush1.bf16.xpose.msra.mxu0 0
        %1321 = vmatprep.subr.bf16.mxu0 0
        %1322 = vmatpush1.bf16.xpose.msra.mxu0 0
        %1323 = vmatprep.subr.bf16.mxu0 0
        %1324 = vmatpush1.bf16.xpose.msra.mxu0 0
        %1325 = vmatprep.subr.bf16.mxu0 0
        %1326 = vmatpush1.bf16.xpose.msra.mxu0 0
        %1327 = vmatprep.subr.bf16.mxu0 0
        %1328 = vmatpush1.bf16.xpose.msra.mxu0 0
        %1329 = vmatprep.mubr.bf16.mxu0 0
        %1330 = vmatmul.mubr.bf16.gmra.mrb[0].mxu0 %v1292
        %v1331 = vpop.f32.mrb[0].mxu0
        %v1332 = vadd.f32 0.0, %v1331
        %v1333 = vpop.f32.mrb[0].mxu0
        %v1334 = vpop.f32.mrb[0].mxu0
        %v1335 = vpop.f32.mrb[0].mxu0
        %1336 = vdwg.mxu0
        %v1337 = vmul.f32 %v1286, 0.35355338
        %v1338 = vmul.f32 %v1332, 0.35355338
        %v1339 = vsel %vm1244, %v1337, -inf
        %1340 = vmax.xlane.f32.xlu0 %v1339
        %v1341 = vpop.xlane.xlu0 %1340
        %v1342 = vsel %vm1244, %v1338, -inf
        %1343 = vmax.xlane.f32.xlu0 %v1342
        %v1344 = vpop.xlane.xlu0 %1343
        %v1345 = vsub.f32 %v1337, %v1341
        %v1346 = vsub.f32 %v1338, %v1344
        %v1347 = vmul.f32 %v1345, 1.442695
        %v1348 = vpow.pop %v1347
        %v1349 = vmul.f32 %v1346, 1.442695
        %v1350 = vpow.pop %v1349
        %v1351 = vsel %vm1244, %v1348, 0.0
        %1352 = vadd.xlane.f32.xlu0 %v1351
        %v1353 = vpop.xlane.xlu0 %1352
        %v1354 = vsel %vm1244, %v1350, 0.0
        %1355 = vadd.xlane.f32.xlu0 %v1354
        %v1356 = vpop.xlane.xlu0 %1355
        %v1357 = vrcp.pop %v1353
        %v1358 = vrcp.pop %v1356
        %v1359 = vmul.f32 %v1348, %v1357
        %v1360 = vmul.f32 %v1350, %v1358
        %v1361 = vpack.c.bf16 %v1359, %v1359
        %v1362 = vpack.c.bf16 %v1360, %v1360
        %v1363 = vpack.c.bf16 %v1147, %v1147
        %v1364 = vpack.c.bf16 %v1235, %v1235
        %v1366 = vsel %vm1244, %v1361, 0
        %vm1368 = vcmask 1043456
        %v1370 = vsel %vm1368, %v1363, 0
        %1372 = vmatprep.subr.bf16.mxu0 0
        %1373 = vmatpush1.bf16.msra.mxu0 %v1370
        %1374 = vmatprep.subr.bf16.mxu0 0
        %1375 = vmatpush1.bf16.msra.mxu0 0
        %1376 = vmatprep.subr.bf16.mxu0 0
        %1377 = vmatpush1.bf16.msra.mxu0 0
        %1378 = vmatprep.subr.bf16.mxu0 0
        %1379 = vmatpush1.bf16.msra.mxu0 0
        %1380 = vmatprep.subr.bf16.mxu0 0
        %1381 = vmatpush1.bf16.msra.mxu0 0
        %1382 = vmatprep.subr.bf16.mxu0 0
        %1383 = vmatpush1.bf16.msra.mxu0 0
        %1384 = vmatprep.subr.bf16.mxu0 0
        %1385 = vmatpush1.bf16.msra.mxu0 0
        %1386 = vmatprep.subr.bf16.mxu0 0
        %1387 = vmatpush1.bf16.msra.mxu0 0
        %1388 = vmatprep.subr.bf16.mxu0 0
        %1389 = vmatpush1.bf16.msra.mxu0 0
        %1390 = vmatprep.subr.bf16.mxu0 0
        %1391 = vmatpush1.bf16.msra.mxu0 0
        %1392 = vmatprep.subr.bf16.mxu0 0
        %1393 = vmatpush1.bf16.msra.mxu0 0
        %1394 = vmatprep.subr.bf16.mxu0 0
        %1395 = vmatpush1.bf16.msra.mxu0 0
        %1396 = vmatprep.subr.bf16.mxu0 0
        %1397 = vmatpush1.bf16.msra.mxu0 0
        %1398 = vmatprep.subr.bf16.mxu0 0
        %1399 = vmatpush1.bf16.msra.mxu0 0
        %1400 = vmatprep.subr.bf16.mxu0 0
        %1401 = vmatpush1.bf16.msra.mxu0 0
        %1402 = vmatprep.subr.bf16.mxu0 0
        %1403 = vmatpush1.bf16.msra.mxu0 0
        %1404 = vmatprep.mubr.bf16.mxu0 0
        %1405 = vmatmul.mubr.bf16.gmra.mrb[0].mxu0 %v1366
        %v1406 = vpop.f32.mrb[0].mxu0
        %v1407 = vadd.f32 0.0, %v1406
        %v1408 = vpop.f32.mrb[0].mxu0
        %v1409 = vpop.f32.mrb[0].mxu0
        %v1410 = vpop.f32.mrb[0].mxu0
        %1411 = vdwg.mxu0
        %v1413 = vsel %vm1244, %v1362, 0
        %v1416 = vsel %vm1368, %v1364, 0
        %1418 = vmatprep.subr.bf16.mxu0 0
        %1419 = vmatpush1.bf16.msra.mxu0 %v1416
        %1420 = vmatprep.subr.bf16.mxu0 0
        %1421 = vmatpush1.bf16.msra.mxu0 0
        %1422 = vmatprep.subr.bf16.mxu0 0
        %1423 = vmatpush1.bf16.msra.mxu0 0
        %1424 = vmatprep.subr.bf16.mxu0 0
        %1425 = vmatpush1.bf16.msra.mxu0 0
        %1426 = vmatprep.subr.bf16.mxu0 0
        %1427 = vmatpush1.bf16.msra.mxu0 0
        %1428 = vmatprep.subr.bf16.mxu0 0
        %1429 = vmatpush1.bf16.msra.mxu0 0
        %1430 = vmatprep.subr.bf16.mxu0 0
        %1431 = vmatpush1.bf16.msra.mxu0 0
        %1432 = vmatprep.subr.bf16.mxu0 0
        %1433 = vmatpush1.bf16.msra.mxu0 0
        %1434 = vmatprep.subr.bf16.mxu0 0
        %1435 = vmatpush1.bf16.msra.mxu0 0
        %1436 = vmatprep.subr.bf16.mxu0 0
        %1437 = vmatpush1.bf16.msra.mxu0 0
        %1438 = vmatprep.subr.bf16.mxu0 0
        %1439 = vmatpush1.bf16.msra.mxu0 0
        %1440 = vmatprep.subr.bf16.mxu0 0
        %1441 = vmatpush1.bf16.msra.mxu0 0
        %1442 = vmatprep.subr.bf16.mxu0 0
        %1443 = vmatpush1.bf16.msra.mxu0 0
        %1444 = vmatprep.subr.bf16.mxu0 0
        %1445 = vmatpush1.bf16.msra.mxu0 0
        %1446 = vmatprep.subr.bf16.mxu0 0
        %1447 = vmatpush1.bf16.msra.mxu0 0
        %1448 = vmatprep.subr.bf16.mxu0 0
        %1449 = vmatpush1.bf16.msra.mxu0 0
        %1450 = vmatprep.mubr.bf16.mxu0 0
        %1451 = vmatmul.mubr.bf16.gmra.mrb[0].mxu0 %v1413
        %v1452 = vpop.f32.mrb[0].mxu0
        %v1453 = vadd.f32 0.0, %v1452
        %v1454 = vpop.f32.mrb[0].mxu0
        %v1455 = vpop.f32.mrb[0].mxu0
        %v1456 = vpop.f32.mrb[0].mxu0
        %1457 = vdwg.mxu0
        %v1458 = vpack.c.bf16 %v1407, %v1407
        %v1459 = vpack.c.bf16 %v1453, %v1453
        %v1460 = vld [vmem:[%s7] sm:$0xf]
        %v1461 = vld [vmem:[%s7 + $0x4] sm:$0xf]
        %v1463 = vsel %vm1244, %v1458, 0
        %v1466 = vsel %vm1368, %v1460, 0
        %1468 = vmatprep.subr.bf16.mxu0 0
        %1469 = vmatpush1.bf16.msra.mxu0 %v1466
        %1470 = vmatprep.subr.bf16.mxu0 0
        %1471 = vmatpush1.bf16.msra.mxu0 0
        %1472 = vmatprep.subr.bf16.mxu0 0
        %1473 = vmatpush1.bf16.msra.mxu0 0
        %1474 = vmatprep.subr.bf16.mxu0 0
        %1475 = vmatpush1.bf16.msra.mxu0 0
        %1476 = vmatprep.subr.bf16.mxu0 0
        %1477 = vmatpush1.bf16.msra.mxu0 0
        %1478 = vmatprep.subr.bf16.mxu0 0
        %1479 = vmatpush1.bf16.msra.mxu0 0
        %1480 = vmatprep.subr.bf16.mxu0 0
        %1481 = vmatpush1.bf16.msra.mxu0 0
        %1482 = vmatprep.subr.bf16.mxu0 0
        %1483 = vmatpush1.bf16.msra.mxu0 0
        %1484 = vmatprep.subr.bf16.mxu0 0
        %1485 = vmatpush1.bf16.msra.mxu0 0
        %1486 = vmatprep.subr.bf16.mxu0 0
        %1487 = vmatpush1.bf16.msra.mxu0 0
        %1488 = vmatprep.subr.bf16.mxu0 0
        %1489 = vmatpush1.bf16.msra.mxu0 0
        %1490 = vmatprep.subr.bf16.mxu0 0
        %1491 = vmatpush1.bf16.msra.mxu0 0
        %1492 = vmatprep.subr.bf16.mxu0 0
        %1493 = vmatpush1.bf16.msra.mxu0 0
        %1494 = vmatprep.subr.bf16.mxu0 0
        %1495 = vmatpush1.bf16.msra.mxu0 0
        %1496 = vmatprep.subr.bf16.mxu0 0
        %1497 = vmatpush1.bf16.msra.mxu0 0
        %1498 = vmatprep.subr.bf16.mxu0 0
        %1499 = vmatpush1.bf16.msra.mxu0 0
        %1500 = vmatprep.mubr.bf16.mxu0 0
        %1501 = vmatmul.mubr.bf16.gmra.mrb[0].mxu0 %v1463
        %v1502 = vpop.f32.mrb[0].mxu0
        %v1503 = vadd.f32 0.0, %v1502
        %v1504 = vpop.f32.mrb[0].mxu0
        %v1505 = vpop.f32.mrb[0].mxu0
        %v1506 = vpop.f32.mrb[0].mxu0
        %1507 = vdwg.mxu0
        %v1509 = vsel %vm1244, %v1459, 0
        %v1512 = vsel %vm1368, %v1461, 0
        %1514 = vmatprep.subr.bf16.mxu0 0
        %1515 = vmatpush1.bf16.msra.mxu0 %v1512
        %1516 = vmatprep.subr.bf16.mxu0 0
        %1517 = vmatpush1.bf16.msra.mxu0 0
        %1518 = vmatprep.subr.bf16.mxu0 0
        %1519 = vmatpush1.bf16.msra.mxu0 0
        %1520 = vmatprep.subr.bf16.mxu0 0
        %1521 = vmatpush1.bf16.msra.mxu0 0
        %1522 = vmatprep.subr.bf16.mxu0 0
        %1523 = vmatpush1.bf16.msra.mxu0 0
        %1524 = vmatprep.subr.bf16.mxu0 0
        %1525 = vmatpush1.bf16.msra.mxu0 0
        %1526 = vmatprep.subr.bf16.mxu0 0
        %1527 = vmatpush1.bf16.msra.mxu0 0
        %1528 = vmatprep.subr.bf16.mxu0 0
        %1529 = vmatpush1.bf16.msra.mxu0 0
        %1530 = vmatprep.subr.bf16.mxu0 0
        %1531 = vmatpush1.bf16.msra.mxu0 0
        %1532 = vmatprep.subr.bf16.mxu0 0
        %1533 = vmatpush1.bf16.msra.mxu0 0
        %1534 = vmatprep.subr.bf16.mxu0 0
        %1535 = vmatpush1.bf16.msra.mxu0 0
        %1536 = vmatprep.subr.bf16.mxu0 0
        %1537 = vmatpush1.bf16.msra.mxu0 0
        %1538 = vmatprep.subr.bf16.mxu0 0
        %1539 = vmatpush1.bf16.msra.mxu0 0
        %1540 = vmatprep.subr.bf16.mxu0 0
        %1541 = vmatpush1.bf16.msra.mxu0 0
        %1542 = vmatprep.subr.bf16.mxu0 0
        %1543 = vmatpush1.bf16.msra.mxu0 0
        %1544 = vmatprep.subr.bf16.mxu0 0
        %1545 = vmatpush1.bf16.msra.mxu0 0
        %1546 = vmatprep.mubr.bf16.mxu0 0
        %1547 = vmatmul.mubr.bf16.gmra.mrb[0].mxu0 %v1509
        %v1548 = vpop.f32.mrb[0].mxu0
        %v1549 = vadd.f32 0.0, %v1548
        %v1550 = vpop.f32.mrb[0].mxu0
        %v1551 = vpop.f32.mrb[0].mxu0
        %v1552 = vpop.f32.mrb[0].mxu0
        %1553 = vdwg.mxu0
        %v1554 = vadd.f32 %v1503, %v1549
        %v1555 = vld [vmem:[%s8] sm:$0x1]
        %v1557 = vlaneseq
        %v1558 = vshrl.u32 %v1557, 7
        %v1559 = vsub.s32 0, %v1558
        %v1560 = vrot.slane %v1555, %v1559
        %v1562 = vadd.f32 %v1554, %v1560
        %v1563 = vunpack.c.l.bf16 %v573
        %v1564 = vadd.f32 %v1562, %v1563
        %v1565 = vld [vmem:[%s9] sm:$0x1]
        %v1566 = vld [vmem:[%s10] sm:$0x1]
        %1567 = vadd.xlane.f32.xlu0 %v1564
        %v1568 = vpop.xlane.xlu0 %1567
        %v1569 = vrcp.pop 128.0
        %v1570 = vmul.f32 %v1568, %v1569
        %v1571 = vsub.f32 %v1564, %v1570
        %v1572 = vmul.f32 %v1571, %v1571
        %1573 = vadd.xlane.f32.xlu0 %v1572
        %v1574 = vpop.xlane.xlu0 %1573
        %v1575 = vmul.f32 %v1574, %v1569
        %v1576 = vadd.f32 %v1575, 1e-05
        %v1577 = vrsqrt.pop %v1576
        %v1578 = vmul.f32 %v1571, %v1577
        %v1580 = vlaneseq
        %v1581 = vshrl.u32 %v1580, 7
        %v1582 = vsub.s32 0, %v1581
        %v1583 = vrot.slane %v1565, %v1582
        %v1585 = vmul.f32 %v1578, %v1583
        %v1587 = vlaneseq
        %v1588 = vshrl.u32 %v1587, 7
        %v1589 = vsub.s32 0, %v1588
        %v1590 = vrot.slane %v1566, %v1589
        %v1592 = vadd.f32 %v1585, %v1590
        %v1593 = vpack.c.bf16 %v1592, %v1592
        %v1594 = vld [vmem:[%s11] sm:$0xff]
        %v1595 = vld [vmem:[%s11 + $0x8] sm:$0xff]
        %v1596 = vld [vmem:[%s11 + $0x10] sm:$0xff]
        %v1597 = vld [vmem:[%s11 + $0x18] sm:$0xff]
        %v1598 = vld [vmem:[%s11 + $0x20] sm:$0xff]
        %v1599 = vld [vmem:[%s11 + $0x28] sm:$0xff]
        %v1600 = vld [vmem:[%s11 + $0x30] sm:$0xff]
        %v1601 = vld [vmem:[%s11 + $0x38] sm:$0xff]
        %v1602 = vld [vmem:[%s11 + $0x40] sm:$0xff]
        %v1603 = vld [vmem:[%s11 + $0x48] sm:$0xff]
        %v1604 = vld [vmem:[%s11 + $0x50] sm:$0xff]
        %v1605 = vld [vmem:[%s11 + $0x58] sm:$0xff]
        %v1606 = vld [vmem:[%s11 + $0x60] sm:$0xff]
        %v1607 = vld [vmem:[%s11 + $0x68] sm:$0xff]
        %v1608 = vld [vmem:[%s11 + $0x70] sm:$0xff]
        %v1609 = vld [vmem:[%s11 + $0x78] sm:$0xff]
        %v1610 = vld [vmem:[%s12] sm:$0x3]
        %v1612 = vlaneseq
        %v1613 = vshrl.u32 %v1612, 7
        %v1614 = vsub.s32 0, %v1613
        %v1615 = vrot.slane %v1610, %v1614
        %v1616 = vlaneseq
        %v1617 = vshrl.u32 %v1616, 7
        %v1618 = vsub.s32 1, %v1617
        %v1619 = vrot.slane %v1610, %v1618
        %v1638 = vunpack.c.l.b16 %v1594
        %v1639 = vunpack.c.h.b16 %v1594
        %v1640 = vunpack.c.l.b16 %v1595
        %v1641 = vunpack.c.h.b16 %v1595
        %v1642 = vunpack.c.l.b16 %v1596
        %v1643 = vunpack.c.h.b16 %v1596
        %v1644 = vunpack.c.l.b16 %v1597
        %v1645 = vunpack.c.h.b16 %v1597
        %v1646 = vunpack.c.l.b16 %v1598
        %v1647 = vunpack.c.h.b16 %v1598
        %v1648 = vunpack.c.l.b16 %v1599
        %v1649 = vunpack.c.h.b16 %v1599
        %v1650 = vunpack.c.l.b16 %v1600
        %v1651 = vunpack.c.h.b16 %v1600
        %v1652 = vunpack.c.l.b16 %v1601
        %v1653 = vunpack.c.h.b16 %v1601
        %v1654 = vunpack.c.l.b16 %v1602
        %v1655 = vunpack.c.h.b16 %v1602
        %v1656 = vunpack.c.l.b16 %v1603
        %v1657 = vunpack.c.h.b16 %v1603
        %v1658 = vunpack.c.l.b16 %v1604
        %v1659 = vunpack.c.h.b16 %v1604
        %v1660 = vunpack.c.l.b16 %v1605
        %v1661 = vunpack.c.h.b16 %v1605
        %v1662 = vunpack.c.l.b16 %v1606
        %v1663 = vunpack.c.h.b16 %v1606
        %v1664 = vunpack.c.l.b16 %v1607
        %v1665 = vunpack.c.h.b16 %v1607
        %v1666 = vunpack.c.l.b16 %v1608
        %v1667 = vunpack.c.h.b16 %v1608
        %v1668 = vunpack.c.l.b16 %v1609
        %v1669 = vunpack.c.h.b16 %v1609
        %v1670 = vpack.c.b16 %v1640, %v1638
        %v1671 = vpack.c.b16 %v1641, %v1639
        %v1672 = vpack.c.b16 %v1644, %v1642
        %v1673 = vpack.c.b16 %v1645, %v1643
        %v1674 = vpack.c.b16 %v1648, %v1646
        %v1675 = vpack.c.b16 %v1649, %v1647
        %v1676 = vpack.c.b16 %v1652, %v1650
        %v1677 = vpack.c.b16 %v1653, %v1651
        %v1678 = vpack.c.b16 %v1656, %v1654
        %v1679 = vpack.c.b16 %v1657, %v1655
        %v1680 = vpack.c.b16 %v1660, %v1658
        %v1681 = vpack.c.b16 %v1661, %v1659
        %v1682 = vpack.c.b16 %v1664, %v1662
        %v1683 = vpack.c.b16 %v1665, %v1663
        %v1684 = vpack.c.b16 %v1668, %v1666
        %v1685 = vpack.c.b16 %v1669, %v1667
        %1702 = vmatprep.subr.bf16.mxu0 %v1671
        %1703 = vmatpush1.bf16.msra.mxu0 %v1670
        %1704 = vmatprep.subr.bf16.mxu0 %v1673
        %1705 = vmatpush1.bf16.msra.mxu0 %v1672
        %1706 = vmatprep.subr.bf16.mxu0 %v1675
        %1707 = vmatpush1.bf16.msra.mxu0 %v1674
        %1708 = vmatprep.subr.bf16.mxu0 %v1677
        %1709 = vmatpush1.bf16.msra.mxu0 %v1676
        %1710 = vmatprep.subr.bf16.mxu0 %v1679
        %1711 = vmatpush1.bf16.msra.mxu0 %v1678
        %1712 = vmatprep.subr.bf16.mxu0 %v1681
        %1713 = vmatpush1.bf16.msra.mxu0 %v1680
        %1714 = vmatprep.subr.bf16.mxu0 %v1683
        %1715 = vmatpush1.bf16.msra.mxu0 %v1682
        %1716 = vmatprep.subr.bf16.mxu0 %v1685
        %1717 = vmatpush1.bf16.msra.mxu0 %v1684
        %1718 = vmatprep.subr.bf16.mxu0 0
        %1719 = vmatpush1.bf16.msra.mxu0 0
        %1720 = vmatprep.subr.bf16.mxu0 0
        %1721 = vmatpush1.bf16.msra.mxu0 0
        %1722 = vmatprep.subr.bf16.mxu0 0
        %1723 = vmatpush1.bf16.msra.mxu0 0
        %1724 = vmatprep.subr.bf16.mxu0 0
        %1725 = vmatpush1.bf16.msra.mxu0 0
        %1726 = vmatprep.subr.bf16.mxu0 0
        %1727 = vmatpush1.bf16.msra.mxu0 0
        %1728 = vmatprep.subr.bf16.mxu0 0
        %1729 = vmatpush1.bf16.msra.mxu0 0
        %1730 = vmatprep.subr.bf16.mxu0 0
        %1731 = vmatpush1.bf16.msra.mxu0 0
        %1732 = vmatprep.subr.bf16.mxu0 0
        %1733 = vmatpush1.bf16.msra.mxu0 0
        %1734 = vmatprep.mubr.bf16.mxu0 0
        %1735 = vmatmul.mubr.bf16.gmra.mrb[0].mxu0 %v1593
        %v1736 = vpop.f32.mrb[0].mxu0
        %v1737 = vadd.f32 %v1615, %v1736
        %v1738 = vpop.f32.mrb[0].mxu0
        %v1739 = vadd.f32 %v1619, %v1738
        %v1740 = vpop.f32.mrb[0].mxu0
        %v1741 = vpop.f32.mrb[0].mxu0
        %1742 = vdwg.mxu0
        %v1743 = vmax.f32 %v1737, 0.0
        %v1744 = vmax.f32 %v1739, 0.0
        %v1745 = vpack.c.bf16 %v1743, %v1743
        %v1746 = vpack.c.bf16 %v1744, %v1744
        %v1747 = vld [vmem:[%s13] sm:$0xf]
        %v1748 = vld [vmem:[%s13 + $0x4] sm:$0xf]
        %v1749 = vld [vmem:[%s13 + $0x8] sm:$0xf]
        %v1750 = vld [vmem:[%s13 + $0xc] sm:$0xf]
        %v1751 = vld [vmem:[%s13 + $0x10] sm:$0xf]
        %v1752 = vld [vmem:[%s13 + $0x14] sm:$0xf]
        %v1753 = vld [vmem:[%s13 + $0x18] sm:$0xf]
        %v1754 = vld [vmem:[%s13 + $0x1c] sm:$0xf]
        %v1755 = vld [vmem:[%s13 + $0x20] sm:$0xf]
        %v1756 = vld [vmem:[%s13 + $0x24] sm:$0xf]
        %v1757 = vld [vmem:[%s13 + $0x28] sm:$0xf]
        %v1758 = vld [vmem:[%s13 + $0x2c] sm:$0xf]
        %v1759 = vld [vmem:[%s13 + $0x30] sm:$0xf]
        %v1760 = vld [vmem:[%s13 + $0x34] sm:$0xf]
        %v1761 = vld [vmem:[%s13 + $0x38] sm:$0xf]
        %v1762 = vld [vmem:[%s13 + $0x3c] sm:$0xf]
        %v1763 = vld [vmem:[%s13 + $0x40] sm:$0xf]
        %v1764 = vld [vmem:[%s13 + $0x44] sm:$0xf]
        %v1765 = vld [vmem:[%s13 + $0x48] sm:$0xf]
        %v1766 = vld [vmem:[%s13 + $0x4c] sm:$0xf]
        %v1767 = vld [vmem:[%s13 + $0x50] sm:$0xf]
        %v1768 = vld [vmem:[%s13 + $0x54] sm:$0xf]
        %v1769 = vld [vmem:[%s13 + $0x58] sm:$0xf]
        %v1770 = vld [vmem:[%s13 + $0x5c] sm:$0xf]
        %v1771 = vld [vmem:[%s13 + $0x60] sm:$0xf]
        %v1772 = vld [vmem:[%s13 + $0x64] sm:$0xf]
        %v1773 = vld [vmem:[%s13 + $0x68] sm:$0xf]
        %v1774 = vld [vmem:[%s13 + $0x6c] sm:$0xf]
        %v1775 = vld [vmem:[%s13 + $0x70] sm:$0xf]
        %v1776 = vld [vmem:[%s13 + $0x74] sm:$0xf]
        %v1777 = vld [vmem:[%s13 + $0x78] sm:$0xf]
        %v1778 = vld [vmem:[%s13 + $0x7c] sm:$0xf]
        %v1779 = vld [vmem:[%s14] sm:$0x1]
        %v1781 = vlaneseq
        %v1782 = vshrl.u32 %v1781, 7
        %v1783 = vsub.s32 0, %v1782
        %v1784 = vrot.slane %v1779, %v1783
        %v1818 = vunpack.c.l.b16 %v1747
        %v1819 = vunpack.c.l.b16 %v1748
        %v1820 = vunpack.c.l.b16 %v1749
        %v1821 = vunpack.c.l.b16 %v1750
        %v1822 = vunpack.c.l.b16 %v1751
        %v1823 = vunpack.c.l.b16 %v1752
        %v1824 = vunpack.c.l.b16 %v1753
        %v1825 = vunpack.c.l.b16 %v1754
        %v1826 = vunpack.c.l.b16 %v1755
        %v1827 = vunpack.c.l.b16 %v1756
        %v1828 = vunpack.c.l.b16 %v1757
        %v1829 = vunpack.c.l.b16 %v1758
        %v1830 = vunpack.c.l.b16 %v1759
        %v1831 = vunpack.c.l.b16 %v1760
        %v1832 = vunpack.c.l.b16 %v1761
        %v1833 = vunpack.c.l.b16 %v1762
        %v1834 = vunpack.c.l.b16 %v1763
        %v1835 = vunpack.c.l.b16 %v1764
        %v1836 = vunpack.c.l.b16 %v1765
        %v1837 = vunpack.c.l.b16 %v1766
        %v1838 = vunpack.c.l.b16 %v1767
        %v1839 = vunpack.c.l.b16 %v1768
        %v1840 = vunpack.c.l.b16 %v1769
        %v1841 = vunpack.c.l.b16 %v1770
        %v1842 = vunpack.c.l.b16 %v1771
        %v1843 = vunpack.c.l.b16 %v1772
        %v1844 = vunpack.c.l.b16 %v1773
        %v1845 = vunpack.c.l.b16 %v1774
        %v1846 = vunpack.c.l.b16 %v1775
        %v1847 = vunpack.c.l.b16 %v1776
        %v1848 = vunpack.c.l.b16 %v1777
        %v1849 = vunpack.c.l.b16 %v1778
        %v1850 = vpack.c.b16 %v1819, %v1818
        %v1851 = vpack.c.b16 %v1821, %v1820
        %v1852 = vpack.c.b16 %v1823, %v1822
        %v1853 = vpack.c.b16 %v1825, %v1824
        %v1854 = vpack.c.b16 %v1827, %v1826
        %v1855 = vpack.c.b16 %v1829, %v1828
        %v1856 = vpack.c.b16 %v1831, %v1830
        %v1857 = vpack.c.b16 %v1833, %v1832
        %v1858 = vpack.c.b16 %v1835, %v1834
        %v1859 = vpack.c.b16 %v1837, %v1836
        %v1860 = vpack.c.b16 %v1839, %v1838
        %v1861 = vpack.c.b16 %v1841, %v1840
        %v1862 = vpack.c.b16 %v1843, %v1842
        %v1863 = vpack.c.b16 %v1845, %v1844
        %v1864 = vpack.c.b16 %v1847, %v1846
        %v1865 = vpack.c.b16 %v1849, %v1848
        %1882 = vmatprep.subr.bf16.mxu0 0
        %1883 = vmatpush1.bf16.msra.mxu0 %v1850
        %1884 = vmatprep.subr.bf16.mxu0 0
        %1885 = vmatpush1.bf16.msra.mxu0 %v1851
        %1886 = vmatprep.subr.bf16.mxu0 0
        %1887 = vmatpush1.bf16.msra.mxu0 %v1852
        %1888 = vmatprep.subr.bf16.mxu0 0
        %1889 = vmatpush1.bf16.msra.mxu0 %v1853
        %1890 = vmatprep.subr.bf16.mxu0 0
        %1891 = vmatpush1.bf16.msra.mxu0 %v1854
        %1892 = vmatprep.subr.bf16.mxu0 0
        %1893 = vmatpush1.bf16.msra.mxu0 %v1855
        %1894 = vmatprep.subr.bf16.mxu0 0
        %1895 = vmatpush1.bf16.msra.mxu0 %v1856
        %1896 = vmatprep.subr.bf16.mxu0 0
        %1897 = vmatpush1.bf16.msra.mxu0 %v1857
        %1898 = vmatprep.subr.bf16.mxu0 0
        %1899 = vmatpush1.bf16.msra.mxu0 %v1858
        %1900 = vmatprep.subr.bf16.mxu0 0
        %1901 = vmatpush1.bf16.msra.mxu0 %v1859
        %1902 = vmatprep.subr.bf16.mxu0 0
        %1903 = vmatpush1.bf16.msra.mxu0 %v1860
        %1904 = vmatprep.subr.bf16.mxu0 0
        %1905 = vmatpush1.bf16.msra.mxu0 %v1861
        %1906 = vmatprep.subr.bf16.mxu0 0
        %1907 = vmatpush1.bf16.msra.mxu0 %v1862
        %1908 = vmatprep.subr.bf16.mxu0 0
        %1909 = vmatpush1.bf16.msra.mxu0 %v1863
        %1910 = vmatprep.subr.bf16.mxu0 0
        %1911 = vmatpush1.bf16.msra.mxu0 %v1864
        %1912 = vmatprep.subr.bf16.mxu0 0
        %1913 = vmatpush1.bf16.msra.mxu0 %v1865
        %1914 = vmatprep.mubr.bf16.mxu0 %v1746
        %1915 = vmatmul.mubr.bf16.gmra.mrb[0].mxu0 %v1745
        %v1916 = vpop.f32.mrb[0].mxu0
        %v1917 = vadd.f32 %v1784, %v1916
        %v1918 = vpop.f32.mrb[0].mxu0
        %v1919 = vpop.f32.mrb[0].mxu0
        %v1920 = vpop.f32.mrb[0].mxu0
        %1921 = vdwg.mxu0
        %v1922 = vadd.f32 %v1917, %v1592
        %v1923 = vld [vmem:[%s15] sm:$0x1]
        %v1924 = vld [vmem:[%s16] sm:$0x1]
        %1925 = vadd.xlane.f32.xlu0 %v1922
        %v1926 = vpop.xlane.xlu0 %1925
        %v1927 = vmul.f32 %v1926, %v1569
        %v1928 = vsub.f32 %v1922, %v1927
        %v1929 = vmul.f32 %v1928, %v1928
        %1930 = vadd.xlane.f32.xlu0 %v1929
        %v1931 = vpop.xlane.xlu0 %1930
        %v1932 = vmul.f32 %v1931, %v1569
        %v1933 = vadd.f32 %v1932, 1e-05
        %v1934 = vrsqrt.pop %v1933
        %v1935 = vmul.f32 %v1928, %v1934
        %v1937 = vlaneseq
        %v1938 = vshrl.u32 %v1937, 7
        %v1939 = vsub.s32 0, %v1938
        %v1940 = vrot.slane %v1923, %v1939
        %v1942 = vmul.f32 %v1935, %v1940
        %v1944 = vlaneseq
        %v1945 = vshrl.u32 %v1944, 7
        %v1946 = vsub.s32 0, %v1945
        %v1947 = vrot.slane %v1924, %v1946
        %v1949 = vadd.f32 %v1942, %v1947
        %1950 = vst [vmem:[%s563] sm:$0xff] %v1949
        %s1951 = sand.u32 %s417, 1
        %s1952 = scalar_lea.sflag [#allocation3], %s1951
        %s1953 = sand.u32 %s417, 1
        %s1954 = smul.addr %s1953, 8
        %s1955 = scalar_lea.vmem [#allocation2], %s1954
        // Predicated region
        $region89: #{tpu_custom_call.1} parent=87 // pred_check
          %p1956 = pneg %p427
        $region90: #{tpu_custom_call.1} parent=87 // pred_check_branch
          %1958 = sbr.rel (%p1956) target = $region92
        $region91: #{tpu_custom_call.1} parent=87 // pred_region
          %s1960 = ssub.s32 128, 128
          %1961 = vsyncadd %s1952, %s1960
          %s1962 = smul.addr %s35, 2
          %s1963 = sadd.s32 %s36, %s1962
          %s1964 = smul.addr %s1963, 128
          %s1965 = scalar_lea.hbm %s17, %s1964
          %s1967 = sshll.u32 %s1955, 4
          %s1968 = int_to_ptr.vmem [resolvable:$true] %s1967
          %1970 = dma.vmem_to_hbm [thread:$0]  %s1968, 128, %s1965, %s1952
        $region92: #{tpu_custom_call.1} parent=87 // pred_fallthru
          _
      $region88: #{tpu_custom_call.1} parent=5 // pred_fallthru
        _
      %p1971 = scmp.le.s32.totalorder 2, %s26
      // Predicated region
      $region93: #{tpu_custom_call.1} parent=5 // pred_check
        %p1972 = pneg %p1971
      $region94: #{tpu_custom_call.1} parent=5 // pred_check_branch
        %1974 = sbr.rel (%p1972) target = $region96
      $region95: #{tpu_custom_call.1} parent=5 // pred_region
        %s1975 = ssub.s32 %s26, 2
        // Predicated region
        $region97: #{tpu_custom_call.1} parent=95 // pred_check
          %p1976 = pneg %p433
        $region98: #{tpu_custom_call.1} parent=95 // pred_check_branch
          %1978 = sbr.rel (%p1976) target = $region100
        $region99: #{tpu_custom_call.1} parent=95 // pred_region
          %s1979 = sand.u32 %s418, 1
          %s1980 = scalar_lea.sflag [#allocation3], %s1979
          %s1981 = sand.u32 %s418, 1
          %s1982 = smul.addr %s1981, 8
          %s1983 = scalar_lea.vmem [#allocation2], %s1982
          %1984 = dma.done %s1980, 128
        $region100: #{tpu_custom_call.1} parent=95 // pred_fallthru
          _
      $region96: #{tpu_custom_call.1} parent=5 // pred_fallthru
        _
    $region6: #{tpu_custom_call.1} parent=1 // loop_footer
      %s30 = sadd.s32 1, %s26
    $region7: #{tpu_custom_call.1} parent=1 // loop_footer_branch
      %25 = sbr.rel target = $region3
    $region8: #{tpu_custom_call.1} parent=1 // loop_exit
      _
    %1985 = vsyncpa [#allocation3], 1
    %s1986 = scalar_lea.sflag [#allocation3], 1
    %1987 = vsyncpa %s1986, 1

</llo_original>
